<compile_context>
chip_gen: v7x
topology: tpu7x:2x2x1
jax: 0.10.0
libtpu: 0.0.40
codegen_flags: <defaults>
</compile_context>

<pallas_src>
import jax
import jax.numpy as jnp
from jax import lax
from jax.experimental import pallas as pl
from jax.experimental.pallas import tpu as pltpu


def _bilstm_kernel(x_ref, w_in_ref, b_in_ref, whf_ref, whb_ref,
                   out_ref, hn_ref, cn_ref,
                   gx_ref, hf_ref, hb_ref):
    """Bidirectional LSTM recurrence, fully inside one Pallas kernel.

    x_ref    : (T*B, E)   embedded (post-dropout) inputs, f32
    w_in_ref : (E, 8H)    bf16  concat([W_ih_fwd.T, W_ih_bwd.T], axis=1)
    b_in_ref : (1, 8H)    f32   concat([b_fwd, b_bwd])  (b_ih + b_hh per dir)
    wh*_ref  : (H, 4H)    bf16  recurrent weights, fwd / bwd
    out_ref  : (T, B, H)  = h_fwd[t] + h_bwd[t]
    hn_ref   : (1, B, H)  = h_n[fwd] + h_n[bwd]
    cn_ref   : (1, B, H)  = c_n[fwd] + c_n[bwd]
    gx_ref   : (T*B, 8H)  f32 scratch: precomputed input gates (both dirs)
    hf_ref   : (T, B, H)  f32 scratch: fwd hidden per step
    hb_ref   : (T, B, H)  f32 scratch: bwd hidden per step
    """
    T, B, H = out_ref.shape
    H4 = 4 * H

    # (1) Hoisted input projection + bias for BOTH directions: one bf16 MXU
    # matmul with f32 accumulation.  Removes x@W_i and the bias broadcast from
    # the serial recurrence below.
    gx_ref[...] = (
        jnp.dot(x_ref[...].astype(jnp.bfloat16), w_in_ref[...],
                preferred_element_type=jnp.float32)
        + b_in_ref[...])

    # Hoist recurrent-weight loads out of the loop (no per-iteration reload).
    whf = whf_ref[...]
    whb = whb_ref[...]

    def cell(gates_x, h, c, wh):
        # h @ W_h on the MXU in bf16, f32 accumulate; gate/state math in f32.
        gates = gates_x + jnp.dot(h.astype(jnp.bfloat16), wh,
                                  preferred_element_type=jnp.float32)
        i = jax.nn.sigmoid(gates[:, 0:H])
        f = jax.nn.sigmoid(gates[:, H:2 * H])
        g = jnp.tanh(gates[:, 2 * H:3 * H])
        o = jax.nn.sigmoid(gates[:, 3 * H:4 * H])
        c_new = f * c + i * g
        h_new = o * jnp.tanh(c_new)
        return h_new, c_new

    zero = jnp.zeros((B, H), jnp.float32)
    h_f, c_f, h_b, c_b = zero, zero, zero, zero

    # (2)+(3) Fused fwd/bwd recurrence, fully unrolled (T static & small): the
    # two direction chains are independent, so one chain's matmul/EUP work
    # fills VLIW slots while the other waits on its result FIFO.  Static t
    # makes every ref index a free static slice/view.
    for t in range(T):
        tb = T - 1 - t
        gx_f = gx_ref[t * B:(t + 1) * B, 0:H4]
        gx_b = gx_ref[tb * B:(tb + 1) * B, H4:2 * H4]
        h_f, c_f = cell(gx_f, h_f, c_f, whf)
        h_b, c_b = cell(gx_b, h_b, c_b, whb)
        hf_ref[t] = h_f
        hb_ref[tb] = h_b

    # (5) One lane-dense full-block store of the summed outputs; no per-step
    # read-modify-write of out_ref.
    out_ref[...] = hf_ref[...] + hb_ref[...]
    hn_ref[0] = h_f + h_b
    cn_ref[0] = c_f + c_b


def bilstm_pallas(x_flat, w_in, b_in, whf, whb, *, T, B):
    H = whf.shape[0]
    vmem = pl.BlockSpec(memory_space=pltpu.MemorySpace.VMEM)
    out_shapes = (
        jax.ShapeDtypeStruct((T, B, H), jnp.float32),   # encoder_outputs (summed)
        jax.ShapeDtypeStruct((1, B, H), jnp.float32),   # h_n (fwd + bwd)
        jax.ShapeDtypeStruct((1, B, H), jnp.float32),   # c_n (fwd + bwd)
    )
    # TODO(synk): at production T/B, tile the time axis with a grid + BlockSpec
    # ("arbitrary") carrying h/c in scratch and double-buffering x blocks,
    # instead of full-array VMEM residency (matters on v7x's 64 MiB VMEM).
    return pl.pallas_call(
        _bilstm_kernel,
        out_shape=out_shapes,
        in_specs=[vmem] * 5,
        out_specs=(vmem, vmem, vmem),
        scratch_shapes=[
            pltpu.VMEM((T * B, 8 * H), jnp.float32),   # precomputed input gates
            pltpu.VMEM((T, B, H), jnp.float32),        # fwd hidden per step
            pltpu.VMEM((T, B, H), jnp.float32),        # bwd hidden per step
        ],
    )(x_flat, w_in, b_in, whf, whb)


def encoder_attention_forward(input_seq, params):
    """Full forward pass.  Embedding lookup is glue (plain JAX gather); the
    LSTM recurrence (the hot path) runs inside the Pallas kernel."""
    T, B = input_seq.shape
    seq_embedded = jnp.take(params["embedding"], input_seq, axis=0)   # (T, B, E)
    # TODO(synk): nn.Dropout() is stochastic in train mode; implemented here as
    # eval-mode identity (inference semantics).
    x_flat = seq_embedded.reshape(T * B, -1)
    return bilstm_pallas(x_flat, params["w_in"], params["b_in"],
                         params["whf"], params["whb"], T=T, B=B)


# ----------------------------- reference (pure JAX) -----------------------------
def _lstm_ref_dir(x, wi, wh, b, cast):
    H = wh.shape[0]
    B = x.shape[1]
    h = jnp.zeros((B, H), jnp.float32)
    c = jnp.zeros((B, H), jnp.float32)
    wi_c = cast(wi)
    wh_c = cast(wh)

    def step(carry, x_t):
        h, c = carry
        g = (jnp.dot(cast(x_t), wi_c, preferred_element_type=jnp.float32)
             + jnp.dot(cast(h), wh_c, preferred_element_type=jnp.float32)
             + b)
        i = jax.nn.sigmoid(g[:, 0:H])
        f = jax.nn.sigmoid(g[:, H:2 * H])
        gg = jnp.tanh(g[:, 2 * H:3 * H])
        o = jax.nn.sigmoid(g[:, 3 * H:4 * H])
        c = f * c + i * gg
        h = o * jnp.tanh(c)
        return (h, c), h

    (h, c), hs = lax.scan(step, (h, c), x)
    return hs, h, c


def _reference(input_seq, rp, cast=lambda a: a):
    x = jnp.take(rp["embedding"], input_seq, axis=0)
    hs_f, hf, cf = _lstm_ref_dir(x, rp["wif"], rp["whf"], rp["bf"], cast)
    hs_b, hb, cb = _lstm_ref_dir(x[::-1], rp["wib"], rp["whb"], rp["bb"], cast)
    hs_b = hs_b[::-1]
    return hs_f + hs_b, (hf + hb)[None], (cf + cb)[None]


# --------------------------------- main -----------------------------------------
if __name__ == "__main__":
    # Small shapes consistent with the module: seq T=8, batch B=2,
    # embedding_size E=32, hidden_size H=32, voc_len=20.
    T, B, E, H, VOC = 8, 2, 32, 32, 20

    key = jax.random.PRNGKey(0)
    keys = jax.random.split(key, 10)

    # Deterministic "normal_" init, mirroring nn.init.normal_ on every param.
    embedding = jax.random.normal(keys[0], (VOC, E), jnp.float32)

    # PyTorch layout: weight_ih (4H, E), weight_hh (4H, H), biases (4H,)
    w_ih_f = jax.random.normal(keys[1], (4 * H, E), jnp.float32)
    w_hh_f = jax.random.normal(keys[2], (4 * H, H), jnp.float32)
    b_ih_f = jax.random.normal(keys[3], (4 * H,), jnp.float32)
    b_hh_f = jax.random.normal(keys[4], (4 * H,), jnp.float32)
    w_ih_b = jax.random.normal(keys[5], (4 * H, E), jnp.float32)
    w_hh_b = jax.random.normal(keys[6], (4 * H, H), jnp.float32)
    b_ih_b = jax.random.normal(keys[7], (4 * H,), jnp.float32)
    b_hh_b = jax.random.normal(keys[8], (4 * H,), jnp.float32)

    # Scale down so sigmoid/tanh don't saturate identically everywhere.
    scale = 0.1
    wif = (w_ih_f.T * scale).astype(jnp.float32)
    whf = (w_hh_f.T * scale).astype(jnp.float32)
    bf = ((b_ih_f + b_hh_f) * scale)[None, :].astype(jnp.float32)
    wib = (w_ih_b.T * scale).astype(jnp.float32)
    whb = (w_hh_b.T * scale).astype(jnp.float32)
    bb = ((b_ih_b + b_hh_b) * scale)[None, :].astype(jnp.float32)

    ref_params = {"embedding": embedding, "wif": wif, "whf": whf, "bf": bf,
                  "wib": wib, "whb": whb, "bb": bb}

    # Kernel params: both directions' input projections fused into one (E, 8H)
    # bf16 matrix with the f32 bias alongside; recurrent weights in bf16.
    params = {
        "embedding": embedding,
        "w_in": jnp.concatenate([wif, wib], axis=1).astype(jnp.bfloat16),
        "b_in": jnp.concatenate([bf, bb], axis=1),
        "whf": whf.astype(jnp.bfloat16),
        "whb": whb.astype(jnp.bfloat16),
    }

    input_seq = jax.random.randint(keys[9], (T, B), 0, VOC, dtype=jnp.int32)

    enc_out, h_n, c_n = encoder_attention_forward(input_seq, params)
    jax.block_until_ready((enc_out, h_n, c_n))

    assert enc_out.shape == (T, B, H)
    assert h_n.shape == (1, B, H) and c_n.shape == (1, B, H)

    # Tight check vs. a reference computing the same math (bf16 MXU operands,
    # f32 accumulation & elementwise).
    to_bf16 = lambda a: a.astype(jnp.bfloat16)
    r_out, r_h, r_c = _reference(input_seq, ref_params, cast=to_bf16)
    assert jnp.allclose(enc_out, r_out, atol=5e-4, rtol=5e-4)
    assert jnp.allclose(h_n, r_h, atol=5e-4, rtol=5e-4)
    assert jnp.allclose(c_n, r_c, atol=5e-4, rtol=5e-4)

    # Sanity check vs. the full-f32 (PyTorch-semantics) reference; bf16 matmul
    # operands introduce only ~1e-3-level deviations at these magnitudes.
    f_out, f_h, f_c = _reference(input_seq, ref_params)
    assert jnp.allclose(enc_out, f_out, atol=5e-2, rtol=5e-2)
    assert jnp.allclose(h_n, f_h, atol=5e-2, rtol=5e-2)
    assert jnp.allclose(c_n, f_c, atol=5e-2, rtol=5e-2)

    print("KERNEL_OK")
</pallas_src>

<mosaic_0001>
module attributes {stable_mosaic.version = 11 : i64} {
  func.func @_bilstm_kernel(%arg0: memref<16x32xf32, #tpu.memory_space<vmem>>, %arg1: memref<32x256xbf16, #tpu.memory_space<vmem>>, %arg2: memref<1x256xf32, #tpu.memory_space<vmem>>, %arg3: memref<32x128xbf16, #tpu.memory_space<vmem>>, %arg4: memref<32x128xbf16, #tpu.memory_space<vmem>>, %arg5: memref<8x2x32xf32, #tpu.memory_space<vmem>>, %arg6: memref<1x2x32xf32, #tpu.memory_space<vmem>>, %arg7: memref<1x2x32xf32, #tpu.memory_space<vmem>>, %arg8: memref<16x256xf32, #tpu.memory_space<vmem>>, %arg9: memref<8x2x32xf32, #tpu.memory_space<vmem>>, %arg10: memref<8x2x32xf32, #tpu.memory_space<vmem>>) attributes {dimension_semantics = [], scalar_prefetch = 0 : i64, scratch_operands = 3 : i64, tpu.core_type = #tpu.core_type<tc>} {
    %c0 = arith.constant 0 : index
    %c0_0 = arith.constant 0 : index
    %0 = vector.load %arg0[%c0, %c0_0] : memref<16x32xf32, #tpu.memory_space<vmem>>, vector<16x32xf32>
    %1 = arith.truncf %0 : vector<16x32xf32> to vector<16x32xbf16>
    %c0_1 = arith.constant 0 : index
    %c0_2 = arith.constant 0 : index
    %2 = vector.load %arg1[%c0_1, %c0_2] : memref<32x256xbf16, #tpu.memory_space<vmem>>, vector<32x256xbf16>
    %cst = arith.constant dense<0.000000e+00> : vector<16x256xf32>
    %3 = tpu.matmul %1, %2, %cst {dimension_numbers = #tpu.dot_dimension_numbers<[1], [0], [0], [1], [0, 0, 1, 1], [], []>} : vector<16x32xbf16>, vector<32x256xbf16>, vector<16x256xf32> -> vector<16x256xf32>
    %c0_3 = arith.constant 0 : index
    %c0_4 = arith.constant 0 : index
    %4 = vector.load %arg2[%c0_3, %c0_4] : memref<1x256xf32, #tpu.memory_space<vmem>>, vector<1x256xf32>
    %5 = vector.broadcast %4 : vector<1x256xf32> to vector<16x256xf32>
    %6 = arith.addf %3, %5 : vector<16x256xf32>
    %c0_5 = arith.constant 0 : index
    %c0_6 = arith.constant 0 : index
    %7 = vector.load %arg8[%c0_5, %c0_6] : memref<16x256xf32, #tpu.memory_space<vmem>>, vector<16x256xf32>
    tpu.vector_store %arg8[%c0_5, %c0_6], %6 {strides = array<i32>} : memref<16x256xf32, #tpu.memory_space<vmem>>, vector<16x256xf32>,
    %c0_7 = arith.constant 0 : index
    %c0_8 = arith.constant 0 : index
    %8 = vector.load %arg3[%c0_7, %c0_8] : memref<32x128xbf16, #tpu.memory_space<vmem>>, vector<32x128xbf16>
    %c0_9 = arith.constant 0 : index
    %c0_10 = arith.constant 0 : index
    %9 = vector.load %arg4[%c0_9, %c0_10] : memref<32x128xbf16, #tpu.memory_space<vmem>>, vector<32x128xbf16>
    %cst_11 = arith.constant 0.000000e+00 : f32
    %10 = vector.broadcast %cst_11 : f32 to vector<2x32xf32>
    %c0_12 = arith.constant 0 : index
    %c0_13 = arith.constant 0 : index
    %11 = vector.load %arg8[%c0_12, %c0_13] : memref<16x256xf32, #tpu.memory_space<vmem>>, vector<2x128xf32>
    %c14 = arith.constant 14 : index
    %c128 = arith.constant 128 : index
    %12 = vector.load %arg8[%c14, %c128] : memref<16x256xf32, #tpu.memory_space<vmem>>, vector<2x128xf32>
    %13 = arith.truncf %10 : vector<2x32xf32> to vector<2x32xbf16>
    %cst_14 = arith.constant dense<0.000000e+00> : vector<2x128xf32>
    %14 = tpu.matmul %13, %8, %cst_14 {dimension_numbers = #tpu.dot_dimension_numbers<[1], [0], [0], [1], [0, 0, 1, 1], [], []>} : vector<2x32xbf16>, vector<32x128xbf16>, vector<2x128xf32> -> vector<2x128xf32>
    %15 = arith.addf %11, %14 : vector<2x128xf32>
    %16 = vector.extract_strided_slice %15 {offsets = [0, 0], sizes = [2, 32], strides = [1, 1]} : vector<2x128xf32> to vector<2x32xf32>
    %17 = arith.negf %16 : vector<2x32xf32>
    %18 = math.exp %17 : vector<2x32xf32>
    %cst_15 = arith.constant 1.000000e+00 : f32
    %19 = vector.broadcast %cst_15 : f32 to vector<2x32xf32>
    %20 = arith.addf %19, %18 : vector<2x32xf32>
    %21 = arith.divf %19, %20 : vector<2x32xf32>
    %22 = vector.extract_strided_slice %15 {offsets = [0, 32], sizes = [2, 32], strides = [1, 1]} : vector<2x128xf32> to vector<2x32xf32>
    %23 = arith.negf %22 : vector<2x32xf32>
    %24 = math.exp %23 : vector<2x32xf32>
    %cst_16 = arith.constant 1.000000e+00 : f32
    %25 = vector.broadcast %cst_16 : f32 to vector<2x32xf32>
    %26 = arith.addf %25, %24 : vector<2x32xf32>
    %27 = arith.divf %25, %26 : vector<2x32xf32>
    %28 = vector.extract_strided_slice %15 {offsets = [0, 64], sizes = [2, 32], strides = [1, 1]} : vector<2x128xf32> to vector<2x32xf32>
    %29 = math.tanh %28 : vector<2x32xf32>
    %30 = vector.extract_strided_slice %15 {offsets = [0, 96], sizes = [2, 32], strides = [1, 1]} : vector<2x128xf32> to vector<2x32xf32>
    %31 = arith.negf %30 : vector<2x32xf32>
    %32 = math.exp %31 : vector<2x32xf32>
    %cst_17 = arith.constant 1.000000e+00 : f32
    %33 = vector.broadcast %cst_17 : f32 to vector<2x32xf32>
    %34 = arith.addf %33, %32 : vector<2x32xf32>
    %35 = arith.divf %33, %34 : vector<2x32xf32>
    %36 = arith.mulf %27, %10 : vector<2x32xf32>
    %37 = arith.mulf %21, %29 : vector<2x32xf32>
    %38 = arith.addf %36, %37 : vector<2x32xf32>
    %39 = math.tanh %38 : vector<2x32xf32>
    %40 = arith.mulf %35, %39 : vector<2x32xf32>
    %41 = arith.truncf %10 : vector<2x32xf32> to vector<2x32xbf16>
    %cst_18 = arith.constant dense<0.000000e+00> : vector<2x128xf32>
    %42 = tpu.matmul %41, %9, %cst_18 {dimension_numbers = #tpu.dot_dimension_numbers<[1], [0], [0], [1], [0, 0, 1, 1], [], []>} : vector<2x32xbf16>, vector<32x128xbf16>, vector<2x128xf32> -> vector<2x128xf32>
    %43 = arith.addf %12, %42 : vector<2x128xf32>
    %44 = vector.extract_strided_slice %43 {offsets = [0, 0], sizes = [2, 32], strides = [1, 1]} : vector<2x128xf32> to vector<2x32xf32>
    %45 = arith.negf %44 : vector<2x32xf32>
    %46 = math.exp %45 : vector<2x32xf32>
    %cst_19 = arith.constant 1.000000e+00 : f32
    %47 = vector.broadcast %cst_19 : f32 to vector<2x32xf32>
    %48 = arith.addf %47, %46 : vector<2x32xf32>
    %49 = arith.divf %47, %48 : vector<2x32xf32>
    %50 = vector.extract_strided_slice %43 {offsets = [0, 32], sizes = [2, 32], strides = [1, 1]} : vector<2x128xf32> to vector<2x32xf32>
    %51 = arith.negf %50 : vector<2x32xf32>
    %52 = math.exp %51 : vector<2x32xf32>
    %cst_20 = arith.constant 1.000000e+00 : f32
    %53 = vector.broadcast %cst_20 : f32 to vector<2x32xf32>
    %54 = arith.addf %53, %52 : vector<2x32xf32>
    %55 = arith.divf %53, %54 : vector<2x32xf32>
    %56 = vector.extract_strided_slice %43 {offsets = [0, 64], sizes = [2, 32], strides = [1, 1]} : vector<2x128xf32> to vector<2x32xf32>
    %57 = math.tanh %56 : vector<2x32xf32>
    %58 = vector.extract_strided_slice %43 {offsets = [0, 96], sizes = [2, 32], strides = [1, 1]} : vector<2x128xf32> to vector<2x32xf32>
    %59 = arith.negf %58 : vector<2x32xf32>
    %60 = math.exp %59 : vector<2x32xf32>
    %cst_21 = arith.constant 1.000000e+00 : f32
    %61 = vector.broadcast %cst_21 : f32 to vector<2x32xf32>
    %62 = arith.addf %61, %60 : vector<2x32xf32>
    %63 = arith.divf %61, %62 : vector<2x32xf32>
    %64 = arith.mulf %55, %10 : vector<2x32xf32>
    %65 = arith.mulf %49, %57 : vector<2x32xf32>
    %66 = arith.addf %64, %65 : vector<2x32xf32>
    %67 = math.tanh %66 : vector<2x32xf32>
    %68 = arith.mulf %63, %67 : vector<2x32xf32>
    %c0_22 = arith.constant 0 : index
    %c0_23 = arith.constant 0 : index
    %c0_24 = arith.constant 0 : index
    %69 = vector.load %arg9[%c0_22, %c0_23, %c0_24] : memref<8x2x32xf32, #tpu.memory_space<vmem>>, vector<1x2x32xf32>
    %70 = vector.shape_cast %69 : vector<1x2x32xf32> to vector<2x32xf32>
    %71 = vector.shape_cast %40 : vector<2x32xf32> to vector<1x2x32xf32>
    tpu.vector_store %arg9[%c0_22, %c0_23, %c0_24], %71 {strides = array<i32>} : memref<8x2x32xf32, #tpu.memory_space<vmem>>, vector<1x2x32xf32>,
    %c7 = arith.constant 7 : index
    %c0_25 = arith.constant 0 : index
    %c0_26 = arith.constant 0 : index
    %72 = vector.load %arg10[%c7, %c0_25, %c0_26] : memref<8x2x32xf32, #tpu.memory_space<vmem>>, vector<1x2x32xf32>
    %73 = vector.shape_cast %72 : vector<1x2x32xf32> to vector<2x32xf32>
    %74 = vector.shape_cast %68 : vector<2x32xf32> to vector<1x2x32xf32>
    tpu.vector_store %arg10[%c7, %c0_25, %c0_26], %74 {strides = array<i32>} : memref<8x2x32xf32, #tpu.memory_space<vmem>>, vector<1x2x32xf32>,
    %c2 = arith.constant 2 : index
    %c0_27 = arith.constant 0 : index
    %75 = vector.load %arg8[%c2, %c0_27] : memref<16x256xf32, #tpu.memory_space<vmem>>, vector<2x128xf32>
    %c12 = arith.constant 12 : index
    %c128_28 = arith.constant 128 : index
    %76 = vector.load %arg8[%c12, %c128_28] : memref<16x256xf32, #tpu.memory_space<vmem>>, vector<2x128xf32>
    %77 = arith.truncf %40 : vector<2x32xf32> to vector<2x32xbf16>
    %cst_29 = arith.constant dense<0.000000e+00> : vector<2x128xf32>
    %78 = tpu.matmul %77, %8, %cst_29 {dimension_numbers = #tpu.dot_dimension_numbers<[1], [0], [0], [1], [0, 0, 1, 1], [], []>} : vector<2x32xbf16>, vector<32x128xbf16>, vector<2x128xf32> -> vector<2x128xf32>
    %79 = arith.addf %75, %78 : vector<2x128xf32>
    %80 = vector.extract_strided_slice %79 {offsets = [0, 0], sizes = [2, 32], strides = [1, 1]} : vector<2x128xf32> to vector<2x32xf32>
    %81 = arith.negf %80 : vector<2x32xf32>
    %82 = math.exp %81 : vector<2x32xf32>
    %cst_30 = arith.constant 1.000000e+00 : f32
    %83 = vector.broadcast %cst_30 : f32 to vector<2x32xf32>
    %84 = arith.addf %83, %82 : vector<2x32xf32>
    %85 = arith.divf %83, %84 : vector<2x32xf32>
    %86 = vector.extract_strided_slice %79 {offsets = [0, 32], sizes = [2, 32], strides = [1, 1]} : vector<2x128xf32> to vector<2x32xf32>
    %87 = arith.negf %86 : vector<2x32xf32>
    %88 = math.exp %87 : vector<2x32xf32>
    %cst_31 = arith.constant 1.000000e+00 : f32
    %89 = vector.broadcast %cst_31 : f32 to vector<2x32xf32>
    %90 = arith.addf %89, %88 : vector<2x32xf32>
    %91 = arith.divf %89, %90 : vector<2x32xf32>
    %92 = vector.extract_strided_slice %79 {offsets = [0, 64], sizes = [2, 32], strides = [1, 1]} : vector<2x128xf32> to vector<2x32xf32>
    %93 = math.tanh %92 : vector<2x32xf32>
    %94 = vector.extract_strided_slice %79 {offsets = [0, 96], sizes = [2, 32], strides = [1, 1]} : vector<2x128xf32> to vector<2x32xf32>
    %95 = arith.negf %94 : vector<2x32xf32>
    %96 = math.exp %95 : vector<2x32xf32>
    %cst_32 = arith.constant 1.000000e+00 : f32
    %97 = vector.broadcast %cst_32 : f32 to vector<2x32xf32>
    %98 = arith.addf %97, %96 : vector<2x32xf32>
    %99 = arith.divf %97, %98 : vector<2x32xf32>
    %100 = arith.mulf %91, %38 : vector<2x32xf32>
    %101 = arith.mulf %85, %93 : vector<2x32xf32>
    %102 = arith.addf %100, %101 : vector<2x32xf32>
    %103 = math.tanh %102 : vector<2x32xf32>
    %104 = arith.mulf %99, %103 : vector<2x32xf32>
    %105 = arith.truncf %68 : vector<2x32xf32> to vector<2x32xbf16>
    %cst_33 = arith.constant dense<0.000000e+00> : vector<2x128xf32>
    %106 = tpu.matmul %105, %9, %cst_33 {dimension_numbers = #tpu.dot_dimension_numbers<[1], [0], [0], [1], [0, 0, 1, 1], [], []>} : vector<2x32xbf16>, vector<32x128xbf16>, vector<2x128xf32> -> vector<2x128xf32>
    %107 = arith.addf %76, %106 : vector<2x128xf32>
    %108 = vector.extract_strided_slice %107 {offsets = [0, 0], sizes = [2, 32], strides = [1, 1]} : vector<2x128xf32> to vector<2x32xf32>
    %109 = arith.negf %108 : vector<2x32xf32>
    %110 = math.exp %109 : vector<2x32xf32>
    %cst_34 = arith.constant 1.000000e+00 : f32
    %111 = vector.broadcast %cst_34 : f32 to vector<2x32xf32>
    %112 = arith.addf %111, %110 : vector<2x32xf32>
    %113 = arith.divf %111, %112 : vector<2x32xf32>
    %114 = vector.extract_strided_slice %107 {offsets = [0, 32], sizes = [2, 32], strides = [1, 1]} : vector<2x128xf32> to vector<2x32xf32>
    %115 = arith.negf %114 : vector<2x32xf32>
    %116 = math.exp %115 : vector<2x32xf32>
    %cst_35 = arith.constant 1.000000e+00 : f32
    %117 = vector.broadcast %cst_35 : f32 to vector<2x32xf32>
    %118 = arith.addf %117, %116 : vector<2x32xf32>
    %119 = arith.divf %117, %118 : vector<2x32xf32>
    %120 = vector.extract_strided_slice %107 {offsets = [0, 64], sizes = [2, 32], strides = [1, 1]} : vector<2x128xf32> to vector<2x32xf32>
    %121 = math.tanh %120 : vector<2x32xf32>
    %122 = vector.extract_strided_slice %107 {offsets = [0, 96], sizes = [2, 32], strides = [1, 1]} : vector<2x128xf32> to vector<2x32xf32>
    %123 = arith.negf %122 : vector<2x32xf32>
    %124 = math.exp %123 : vector<2x32xf32>
    %cst_36 = arith.constant 1.000000e+00 : f32
    %125 = vector.broadcast %cst_36 : f32 to vector<2x32xf32>
    %126 = arith.addf %125, %124 : vector<2x32xf32>
    %127 = arith.divf %125, %126 : vector<2x32xf32>
    %128 = arith.mulf %119, %66 : vector<2x32xf32>
    %129 = arith.mulf %113, %121 : vector<2x32xf32>
    %130 = arith.addf %128, %129 : vector<2x32xf32>
    %131 = math.tanh %130 : vector<2x32xf32>
    %132 = arith.mulf %127, %131 : vector<2x32xf32>
    %c1 = arith.constant 1 : index
    %c0_37 = arith.constant 0 : index
    %c0_38 = arith.constant 0 : index
    %133 = vector.load %arg9[%c1, %c0_37, %c0_38] : memref<8x2x32xf32, #tpu.memory_space<vmem>>, vector<1x2x32xf32>
    %134 = vector.shape_cast %133 : vector<1x2x32xf32> to vector<2x32xf32>
    %135 = vector.shape_cast %104 : vector<2x32xf32> to vector<1x2x32xf32>
    tpu.vector_store %arg9[%c1, %c0_37, %c0_38], %135 {strides = array<i32>} : memref<8x2x32xf32, #tpu.memory_space<vmem>>, vector<1x2x32xf32>,
    %c6 = arith.constant 6 : index
    %c0_39 = arith.constant 0 : index
    %c0_40 = arith.constant 0 : index
    %136 = vector.load %arg10[%c6, %c0_39, %c0_40] : memref<8x2x32xf32, #tpu.memory_space<vmem>>, vector<1x2x32xf32>
    %137 = vector.shape_cast %136 : vector<1x2x32xf32> to vector<2x32xf32>
    %138 = vector.shape_cast %132 : vector<2x32xf32> to vector<1x2x32xf32>
    tpu.vector_store %arg10[%c6, %c0_39, %c0_40], %138 {strides = array<i32>} : memref<8x2x32xf32, #tpu.memory_space<vmem>>, vector<1x2x32xf32>,
    %c4 = arith.constant 4 : index
    %c0_41 = arith.constant 0 : index
    %139 = vector.load %arg8[%c4, %c0_41] : memref<16x256xf32, #tpu.memory_space<vmem>>, vector<2x128xf32>
    %c10 = arith.constant 10 : index
    %c128_42 = arith.constant 128 : index
    %140 = vector.load %arg8[%c10, %c128_42] : memref<16x256xf32, #tpu.memory_space<vmem>>, vector<2x128xf32>
    %141 = arith.truncf %104 : vector<2x32xf32> to vector<2x32xbf16>
    %cst_43 = arith.constant dense<0.000000e+00> : vector<2x128xf32>
    %142 = tpu.matmul %141, %8, %cst_43 {dimension_numbers = #tpu.dot_dimension_numbers<[1], [0], [0], [1], [0, 0, 1, 1], [], []>} : vector<2x32xbf16>, vector<32x128xbf16>, vector<2x128xf32> -> vector<2x128xf32>
    %143 = arith.addf %139, %142 : vector<2x128xf32>
    %144 = vector.extract_strided_slice %143 {offsets = [0, 0], sizes = [2, 32], strides = [1, 1]} : vector<2x128xf32> to vector<2x32xf32>
    %145 = arith.negf %144 : vector<2x32xf32>
    %146 = math.exp %145 : vector<2x32xf32>
    %cst_44 = arith.constant 1.000000e+00 : f32
    %147 = vector.broadcast %cst_44 : f32 to vector<2x32xf32>
    %148 = arith.addf %147, %146 : vector<2x32xf32>
    %149 = arith.divf %147, %148 : vector<2x32xf32>
    %150 = vector.extract_strided_slice %143 {offsets = [0, 32], sizes = [2, 32], strides = [1, 1]} : vector<2x128xf32> to vector<2x32xf32>
    %151 = arith.negf %150 : vector<2x32xf32>
    %152 = math.exp %151 : vector<2x32xf32>
    %cst_45 = arith.constant 1.000000e+00 : f32
    %153 = vector.broadcast %cst_45 : f32 to vector<2x32xf32>
    %154 = arith.addf %153, %152 : vector<2x32xf32>
    %155 = arith.divf %153, %154 : vector<2x32xf32>
    %156 = vector.extract_strided_slice %143 {offsets = [0, 64], sizes = [2, 32], strides = [1, 1]} : vector<2x128xf32> to vector<2x32xf32>
    %157 = math.tanh %156 : vector<2x32xf32>
    %158 = vector.extract_strided_slice %143 {offsets = [0, 96], sizes = [2, 32], strides = [1, 1]} : vector<2x128xf32> to vector<2x32xf32>
    %159 = arith.negf %158 : vector<2x32xf32>
    %160 = math.exp %159 : vector<2x32xf32>
    %cst_46 = arith.constant 1.000000e+00 : f32
    %161 = vector.broadcast %cst_46 : f32 to vector<2x32xf32>
    %162 = arith.addf %161, %160 : vector<2x32xf32>
    %163 = arith.divf %161, %162 : vector<2x32xf32>
    %164 = arith.mulf %155, %102 : vector<2x32xf32>
    %165 = arith.mulf %149, %157 : vector<2x32xf32>
    %166 = arith.addf %164, %165 : vector<2x32xf32>
    %167 = math.tanh %166 : vector<2x32xf32>
    %168 = arith.mulf %163, %167 : vector<2x32xf32>
    %169 = arith.truncf %132 : vector<2x32xf32> to vector<2x32xbf16>
    %cst_47 = arith.constant dense<0.000000e+00> : vector<2x128xf32>
    %170 = tpu.matmul %169, %9, %cst_47 {dimension_numbers = #tpu.dot_dimension_numbers<[1], [0], [0], [1], [0, 0, 1, 1], [], []>} : vector<2x32xbf16>, vector<32x128xbf16>, vector<2x128xf32> -> vector<2x128xf32>
    %171 = arith.addf %140, %170 : vector<2x128xf32>
    %172 = vector.extract_strided_slice %171 {offsets = [0, 0], sizes = [2, 32], strides = [1, 1]} : vector<2x128xf32> to vector<2x32xf32>
    %173 = arith.negf %172 : vector<2x32xf32>
    %174 = math.exp %173 : vector<2x32xf32>
    %cst_48 = arith.constant 1.000000e+00 : f32
    %175 = vector.broadcast %cst_48 : f32 to vector<2x32xf32>
    %176 = arith.addf %175, %174 : vector<2x32xf32>
    %177 = arith.divf %175, %176 : vector<2x32xf32>
    %178 = vector.extract_strided_slice %171 {offsets = [0, 32], sizes = [2, 32], strides = [1, 1]} : vector<2x128xf32> to vector<2x32xf32>
    %179 = arith.negf %178 : vector<2x32xf32>
    %180 = math.exp %179 : vector<2x32xf32>
    %cst_49 = arith.constant 1.000000e+00 : f32
    %181 = vector.broadcast %cst_49 : f32 to vector<2x32xf32>
    %182 = arith.addf %181, %180 : vector<2x32xf32>
    %183 = arith.divf %181, %182 : vector<2x32xf32>
    %184 = vector.extract_strided_slice %171 {offsets = [0, 64], sizes = [2, 32], strides = [1, 1]} : vector<2x128xf32> to vector<2x32xf32>
    %185 = math.tanh %184 : vector<2x32xf32>
    %186 = vector.extract_strided_slice %171 {offsets = [0, 96], sizes = [2, 32], strides = [1, 1]} : vector<2x128xf32> to vector<2x32xf32>
    %187 = arith.negf %186 : vector<2x32xf32>
    %188 = math.exp %187 : vector<2x32xf32>
    %cst_50 = arith.constant 1.000000e+00 : f32
    %189 = vector.broadcast %cst_50 : f32 to vector<2x32xf32>
    %190 = arith.addf %189, %188 : vector<2x32xf32>
    %191 = arith.divf %189, %190 : vector<2x32xf32>
    %192 = arith.mulf %183, %130 : vector<2x32xf32>
    %193 = arith.mulf %177, %185 : vector<2x32xf32>
    %194 = arith.addf %192, %193 : vector<2x32xf32>
    %195 = math.tanh %194 : vector<2x32xf32>
    %196 = arith.mulf %191, %195 : vector<2x32xf32>
    %c2_51 = arith.constant 2 : index
    %c0_52 = arith.constant 0 : index
    %c0_53 = arith.constant 0 : index
    %197 = vector.load %arg9[%c2_51, %c0_52, %c0_53] : memref<8x2x32xf32, #tpu.memory_space<vmem>>, vector<1x2x32xf32>
    %198 = vector.shape_cast %197 : vector<1x2x32xf32> to vector<2x32xf32>
    %199 = vector.shape_cast %168 : vector<2x32xf32> to vector<1x2x32xf32>
    tpu.vector_store %arg9[%c2_51, %c0_52, %c0_53], %199 {strides = array<i32>} : memref<8x2x32xf32, #tpu.memory_space<vmem>>, vector<1x2x32xf32>,
    %c5 = arith.constant 5 : index
    %c0_54 = arith.constant 0 : index
    %c0_55 = arith.constant 0 : index
    %200 = vector.load %arg10[%c5, %c0_54, %c0_55] : memref<8x2x32xf32, #tpu.memory_space<vmem>>, vector<1x2x32xf32>
    %201 = vector.shape_cast %200 : vector<1x2x32xf32> to vector<2x32xf32>
    %202 = vector.shape_cast %196 : vector<2x32xf32> to vector<1x2x32xf32>
    tpu.vector_store %arg10[%c5, %c0_54, %c0_55], %202 {strides = array<i32>} : memref<8x2x32xf32, #tpu.memory_space<vmem>>, vector<1x2x32xf32>,
    %c6_56 = arith.constant 6 : index
    %c0_57 = arith.constant 0 : index
    %203 = vector.load %arg8[%c6_56, %c0_57] : memref<16x256xf32, #tpu.memory_space<vmem>>, vector<2x128xf32>
    %c8 = arith.constant 8 : index
    %c128_58 = arith.constant 128 : index
    %204 = vector.load %arg8[%c8, %c128_58] : memref<16x256xf32, #tpu.memory_space<vmem>>, vector<2x128xf32>
    %205 = arith.truncf %168 : vector<2x32xf32> to vector<2x32xbf16>
    %cst_59 = arith.constant dense<0.000000e+00> : vector<2x128xf32>
    %206 = tpu.matmul %205, %8, %cst_59 {dimension_numbers = #tpu.dot_dimension_numbers<[1], [0], [0], [1], [0, 0, 1, 1], [], []>} : vector<2x32xbf16>, vector<32x128xbf16>, vector<2x128xf32> -> vector<2x128xf32>
    %207 = arith.addf %203, %206 : vector<2x128xf32>
    %208 = vector.extract_strided_slice %207 {offsets = [0, 0], sizes = [2, 32], strides = [1, 1]} : vector<2x128xf32> to vector<2x32xf32>
    %209 = arith.negf %208 : vector<2x32xf32>
    %210 = math.exp %209 : vector<2x32xf32>
    %cst_60 = arith.constant 1.000000e+00 : f32
    %211 = vector.broadcast %cst_60 : f32 to vector<2x32xf32>
    %212 = arith.addf %211, %210 : vector<2x32xf32>
    %213 = arith.divf %211, %212 : vector<2x32xf32>
    %214 = vector.extract_strided_slice %207 {offsets = [0, 32], sizes = [2, 32], strides = [1, 1]} : vector<2x128xf32> to vector<2x32xf32>
    %215 = arith.negf %214 : vector<2x32xf32>
    %216 = math.exp %215 : vector<2x32xf32>
    %cst_61 = arith.constant 1.000000e+00 : f32
    %217 = vector.broadcast %cst_61 : f32 to vector<2x32xf32>
    %218 = arith.addf %217, %216 : vector<2x32xf32>
    %219 = arith.divf %217, %218 : vector<2x32xf32>
    %220 = vector.extract_strided_slice %207 {offsets = [0, 64], sizes = [2, 32], strides = [1, 1]} : vector<2x128xf32> to vector<2x32xf32>
    %221 = math.tanh %220 : vector<2x32xf32>
    %222 = vector.extract_strided_slice %207 {offsets = [0, 96], sizes = [2, 32], strides = [1, 1]} : vector<2x128xf32> to vector<2x32xf32>
    %223 = arith.negf %222 : vector<2x32xf32>
    %224 = math.exp %223 : vector<2x32xf32>
    %cst_62 = arith.constant 1.000000e+00 : f32
    %225 = vector.broadcast %cst_62 : f32 to vector<2x32xf32>
    %226 = arith.addf %225, %224 : vector<2x32xf32>
    %227 = arith.divf %225, %226 : vector<2x32xf32>
    %228 = arith.mulf %219, %166 : vector<2x32xf32>
    %229 = arith.mulf %213, %221 : vector<2x32xf32>
    %230 = arith.addf %228, %229 : vector<2x32xf32>
    %231 = math.tanh %230 : vector<2x32xf32>
    %232 = arith.mulf %227, %231 : vector<2x32xf32>
    %233 = arith.truncf %196 : vector<2x32xf32> to vector<2x32xbf16>
    %cst_63 = arith.constant dense<0.000000e+00> : vector<2x128xf32>
    %234 = tpu.matmul %233, %9, %cst_63 {dimension_numbers = #tpu.dot_dimension_numbers<[1], [0], [0], [1], [0, 0, 1, 1], [], []>} : vector<2x32xbf16>, vector<32x128xbf16>, vector<2x128xf32> -> vector<2x128xf32>
    %235 = arith.addf %204, %234 : vector<2x128xf32>
    %236 = vector.extract_strided_slice %235 {offsets = [0, 0], sizes = [2, 32], strides = [1, 1]} : vector<2x128xf32> to vector<2x32xf32>
    %237 = arith.negf %236 : vector<2x32xf32>
    %238 = math.exp %237 : vector<2x32xf32>
    %cst_64 = arith.constant 1.000000e+00 : f32
    %239 = vector.broadcast %cst_64 : f32 to vector<2x32xf32>
    %240 = arith.addf %239, %238 : vector<2x32xf32>
    %241 = arith.divf %239, %240 : vector<2x32xf32>
    %242 = vector.extract_strided_slice %235 {offsets = [0, 32], sizes = [2, 32], strides = [1, 1]} : vector<2x128xf32> to vector<2x32xf32>
    %243 = arith.negf %242 : vector<2x32xf32>
    %244 = math.exp %243 : vector<2x32xf32>
    %cst_65 = arith.constant 1.000000e+00 : f32
    %245 = vector.broadcast %cst_65 : f32 to vector<2x32xf32>
    %246 = arith.addf %245, %244 : vector<2x32xf32>
    %247 = arith.divf %245, %246 : vector<2x32xf32>
    %248 = vector.extract_strided_slice %235 {offsets = [0, 64], sizes = [2, 32], strides = [1, 1]} : vector<2x128xf32> to vector<2x32xf32>
    %249 = math.tanh %248 : vector<2x32xf32>
    %250 = vector.extract_strided_slice %235 {offsets = [0, 96], sizes = [2, 32], strides = [1, 1]} : vector<2x128xf32> to vector<2x32xf32>
    %251 = arith.negf %250 : vector<2x32xf32>
    %252 = math.exp %251 : vector<2x32xf32>
    %cst_66 = arith.constant 1.000000e+00 : f32
    %253 = vector.broadcast %cst_66 : f32 to vector<2x32xf32>
    %254 = arith.addf %253, %252 : vector<2x32xf32>
    %255 = arith.divf %253, %254 : vector<2x32xf32>
    %256 = arith.mulf %247, %194 : vector<2x32xf32>
    %257 = arith.mulf %241, %249 : vector<2x32xf32>
    %258 = arith.addf %256, %257 : vector<2x32xf32>
    %259 = math.tanh %258 : vector<2x32xf32>
    %260 = arith.mulf %255, %259 : vector<2x32xf32>
    %c3 = arith.constant 3 : index
    %c0_67 = arith.constant 0 : index
    %c0_68 = arith.constant 0 : index
    %261 = vector.load %arg9[%c3, %c0_67, %c0_68] : memref<8x2x32xf32, #tpu.memory_space<vmem>>, vector<1x2x32xf32>
    %262 = vector.shape_cast %261 : vector<1x2x32xf32> to vector<2x32xf32>
    %263 = vector.shape_cast %232 : vector<2x32xf32> to vector<1x2x32xf32>
    tpu.vector_store %arg9[%c3, %c0_67, %c0_68], %263 {strides = array<i32>} : memref<8x2x32xf32, #tpu.memory_space<vmem>>, vector<1x2x32xf32>,
    %c4_69 = arith.constant 4 : index
    %c0_70 = arith.constant 0 : index
    %c0_71 = arith.constant 0 : index
    %264 = vector.load %arg10[%c4_69, %c0_70, %c0_71] : memref<8x2x32xf32, #tpu.memory_space<vmem>>, vector<1x2x32xf32>
    %265 = vector.shape_cast %264 : vector<1x2x32xf32> to vector<2x32xf32>
    %266 = vector.shape_cast %260 : vector<2x32xf32> to vector<1x2x32xf32>
    tpu.vector_store %arg10[%c4_69, %c0_70, %c0_71], %266 {strides = array<i32>} : memref<8x2x32xf32, #tpu.memory_space<vmem>>, vector<1x2x32xf32>,
    %c8_72 = arith.constant 8 : index
    %c0_73 = arith.constant 0 : index
    %267 = vector.load %arg8[%c8_72, %c0_73] : memref<16x256xf32, #tpu.memory_space<vmem>>, vector<2x128xf32>
    %c6_74 = arith.constant 6 : index
    %c128_75 = arith.constant 128 : index
    %268 = vector.load %arg8[%c6_74, %c128_75] : memref<16x256xf32, #tpu.memory_space<vmem>>, vector<2x128xf32>
    %269 = arith.truncf %232 : vector<2x32xf32> to vector<2x32xbf16>
    %cst_76 = arith.constant dense<0.000000e+00> : vector<2x128xf32>
    %270 = tpu.matmul %269, %8, %cst_76 {dimension_numbers = #tpu.dot_dimension_numbers<[1], [0], [0], [1], [0, 0, 1, 1], [], []>} : vector<2x32xbf16>, vector<32x128xbf16>, vector<2x128xf32> -> vector<2x128xf32>
    %271 = arith.addf %267, %270 : vector<2x128xf32>
    %272 = vector.extract_strided_slice %271 {offsets = [0, 0], sizes = [2, 32], strides = [1, 1]} : vector<2x128xf32> to vector<2x32xf32>
    %273 = arith.negf %272 : vector<2x32xf32>
    %274 = math.exp %273 : vector<2x32xf32>
    %cst_77 = arith.constant 1.000000e+00 : f32
    %275 = vector.broadcast %cst_77 : f32 to vector<2x32xf32>
    %276 = arith.addf %275, %274 : vector<2x32xf32>
    %277 = arith.divf %275, %276 : vector<2x32xf32>
    %278 = vector.extract_strided_slice %271 {offsets = [0, 32], sizes = [2, 32], strides = [1, 1]} : vector<2x128xf32> to vector<2x32xf32>
    %279 = arith.negf %278 : vector<2x32xf32>
    %280 = math.exp %279 : vector<2x32xf32>
    %cst_78 = arith.constant 1.000000e+00 : f32
    %281 = vector.broadcast %cst_78 : f32 to vector<2x32xf32>
    %282 = arith.addf %281, %280 : vector<2x32xf32>
    %283 = arith.divf %281, %282 : vector<2x32xf32>
    %284 = vector.extract_strided_slice %271 {offsets = [0, 64], sizes = [2, 32], strides = [1, 1]} : vector<2x128xf32> to vector<2x32xf32>
    %285 = math.tanh %284 : vector<2x32xf32>
    %286 = vector.extract_strided_slice %271 {offsets = [0, 96], sizes = [2, 32], strides = [1, 1]} : vector<2x128xf32> to vector<2x32xf32>
    %287 = arith.negf %286 : vector<2x32xf32>
    %288 = math.exp %287 : vector<2x32xf32>
    %cst_79 = arith.constant 1.000000e+00 : f32
    %289 = vector.broadcast %cst_79 : f32 to vector<2x32xf32>
    %290 = arith.addf %289, %288 : vector<2x32xf32>
    %291 = arith.divf %289, %290 : vector<2x32xf32>
    %292 = arith.mulf %283, %230 : vector<2x32xf32>
    %293 = arith.mulf %277, %285 : vector<2x32xf32>
    %294 = arith.addf %292, %293 : vector<2x32xf32>
    %295 = math.tanh %294 : vector<2x32xf32>
    %296 = arith.mulf %291, %295 : vector<2x32xf32>
    %297 = arith.truncf %260 : vector<2x32xf32> to vector<2x32xbf16>
    %cst_80 = arith.constant dense<0.000000e+00> : vector<2x128xf32>
    %298 = tpu.matmul %297, %9, %cst_80 {dimension_numbers = #tpu.dot_dimension_numbers<[1], [0], [0], [1], [0, 0, 1, 1], [], []>} : vector<2x32xbf16>, vector<32x128xbf16>, vector<2x128xf32> -> vector<2x128xf32>
    %299 = arith.addf %268, %298 : vector<2x128xf32>
    %300 = vector.extract_strided_slice %299 {offsets = [0, 0], sizes = [2, 32], strides = [1, 1]} : vector<2x128xf32> to vector<2x32xf32>
    %301 = arith.negf %300 : vector<2x32xf32>
    %302 = math.exp %301 : vector<2x32xf32>
    %cst_81 = arith.constant 1.000000e+00 : f32
    %303 = vector.broadcast %cst_81 : f32 to vector<2x32xf32>
    %304 = arith.addf %303, %302 : vector<2x32xf32>
    %305 = arith.divf %303, %304 : vector<2x32xf32>
    %306 = vector.extract_strided_slice %299 {offsets = [0, 32], sizes = [2, 32], strides = [1, 1]} : vector<2x128xf32> to vector<2x32xf32>
    %307 = arith.negf %306 : vector<2x32xf32>
    %308 = math.exp %307 : vector<2x32xf32>
    %cst_82 = arith.constant 1.000000e+00 : f32
    %309 = vector.broadcast %cst_82 : f32 to vector<2x32xf32>
    %310 = arith.addf %309, %308 : vector<2x32xf32>
    %311 = arith.divf %309, %310 : vector<2x32xf32>
    %312 = vector.extract_strided_slice %299 {offsets = [0, 64], sizes = [2, 32], strides = [1, 1]} : vector<2x128xf32> to vector<2x32xf32>
    %313 = math.tanh %312 : vector<2x32xf32>
    %314 = vector.extract_strided_slice %299 {offsets = [0, 96], sizes = [2, 32], strides = [1, 1]} : vector<2x128xf32> to vector<2x32xf32>
    %315 = arith.negf %314 : vector<2x32xf32>
    %316 = math.exp %315 : vector<2x32xf32>
    %cst_83 = arith.constant 1.000000e+00 : f32
    %317 = vector.broadcast %cst_83 : f32 to vector<2x32xf32>
    %318 = arith.addf %317, %316 : vector<2x32xf32>
    %319 = arith.divf %317, %318 : vector<2x32xf32>
    %320 = arith.mulf %311, %258 : vector<2x32xf32>
    %321 = arith.mulf %305, %313 : vector<2x32xf32>
    %322 = arith.addf %320, %321 : vector<2x32xf32>
    %323 = math.tanh %322 : vector<2x32xf32>
    %324 = arith.mulf %319, %323 : vector<2x32xf32>
    %c4_84 = arith.constant 4 : index
    %c0_85 = arith.constant 0 : index
    %c0_86 = arith.constant 0 : index
    %325 = vector.load %arg9[%c4_84, %c0_85, %c0_86] : memref<8x2x32xf32, #tpu.memory_space<vmem>>, vector<1x2x32xf32>
    %326 = vector.shape_cast %325 : vector<1x2x32xf32> to vector<2x32xf32>
    %327 = vector.shape_cast %296 : vector<2x32xf32> to vector<1x2x32xf32>
    tpu.vector_store %arg9[%c4_84, %c0_85, %c0_86], %327 {strides = array<i32>} : memref<8x2x32xf32, #tpu.memory_space<vmem>>, vector<1x2x32xf32>,
    %c3_87 = arith.constant 3 : index
    %c0_88 = arith.constant 0 : index
    %c0_89 = arith.constant 0 : index
    %328 = vector.load %arg10[%c3_87, %c0_88, %c0_89] : memref<8x2x32xf32, #tpu.memory_space<vmem>>, vector<1x2x32xf32>
    %329 = vector.shape_cast %328 : vector<1x2x32xf32> to vector<2x32xf32>
    %330 = vector.shape_cast %324 : vector<2x32xf32> to vector<1x2x32xf32>
    tpu.vector_store %arg10[%c3_87, %c0_88, %c0_89], %330 {strides = array<i32>} : memref<8x2x32xf32, #tpu.memory_space<vmem>>, vector<1x2x32xf32>,
    %c10_90 = arith.constant 10 : index
    %c0_91 = arith.constant 0 : index
    %331 = vector.load %arg8[%c10_90, %c0_91] : memref<16x256xf32, #tpu.memory_space<vmem>>, vector<2x128xf32>
    %c4_92 = arith.constant 4 : index
    %c128_93 = arith.constant 128 : index
    %332 = vector.load %arg8[%c4_92, %c128_93] : memref<16x256xf32, #tpu.memory_space<vmem>>, vector<2x128xf32>
    %333 = arith.truncf %296 : vector<2x32xf32> to vector<2x32xbf16>
    %cst_94 = arith.constant dense<0.000000e+00> : vector<2x128xf32>
    %334 = tpu.matmul %333, %8, %cst_94 {dimension_numbers = #tpu.dot_dimension_numbers<[1], [0], [0], [1], [0, 0, 1, 1], [], []>} : vector<2x32xbf16>, vector<32x128xbf16>, vector<2x128xf32> -> vector<2x128xf32>
    %335 = arith.addf %331, %334 : vector<2x128xf32>
    %336 = vector.extract_strided_slice %335 {offsets = [0, 0], sizes = [2, 32], strides = [1, 1]} : vector<2x128xf32> to vector<2x32xf32>
    %337 = arith.negf %336 : vector<2x32xf32>
    %338 = math.exp %337 : vector<2x32xf32>
    %cst_95 = arith.constant 1.000000e+00 : f32
    %339 = vector.broadcast %cst_95 : f32 to vector<2x32xf32>
    %340 = arith.addf %339, %338 : vector<2x32xf32>
    %341 = arith.divf %339, %340 : vector<2x32xf32>
    %342 = vector.extract_strided_slice %335 {offsets = [0, 32], sizes = [2, 32], strides = [1, 1]} : vector<2x128xf32> to vector<2x32xf32>
    %343 = arith.negf %342 : vector<2x32xf32>
    %344 = math.exp %343 : vector<2x32xf32>
    %cst_96 = arith.constant 1.000000e+00 : f32
    %345 = vector.broadcast %cst_96 : f32 to vector<2x32xf32>
    %346 = arith.addf %345, %344 : vector<2x32xf32>
    %347 = arith.divf %345, %346 : vector<2x32xf32>
    %348 = vector.extract_strided_slice %335 {offsets = [0, 64], sizes = [2, 32], strides = [1, 1]} : vector<2x128xf32> to vector<2x32xf32>
    %349 = math.tanh %348 : vector<2x32xf32>
    %350 = vector.extract_strided_slice %335 {offsets = [0, 96], sizes = [2, 32], strides = [1, 1]} : vector<2x128xf32> to vector<2x32xf32>
    %351 = arith.negf %350 : vector<2x32xf32>
    %352 = math.exp %351 : vector<2x32xf32>
    %cst_97 = arith.constant 1.000000e+00 : f32
    %353 = vector.broadcast %cst_97 : f32 to vector<2x32xf32>
    %354 = arith.addf %353, %352 : vector<2x32xf32>
    %355 = arith.divf %353, %354 : vector<2x32xf32>
    %356 = arith.mulf %347, %294 : vector<2x32xf32>
    %357 = arith.mulf %341, %349 : vector<2x32xf32>
    %358 = arith.addf %356, %357 : vector<2x32xf32>
    %359 = math.tanh %358 : vector<2x32xf32>
    %360 = arith.mulf %355, %359 : vector<2x32xf32>
    %361 = arith.truncf %324 : vector<2x32xf32> to vector<2x32xbf16>
    %cst_98 = arith.constant dense<0.000000e+00> : vector<2x128xf32>
    %362 = tpu.matmul %361, %9, %cst_98 {dimension_numbers = #tpu.dot_dimension_numbers<[1], [0], [0], [1], [0, 0, 1, 1], [], []>} : vector<2x32xbf16>, vector<32x128xbf16>, vector<2x128xf32> -> vector<2x128xf32>
    %363 = arith.addf %332, %362 : vector<2x128xf32>
    %364 = vector.extract_strided_slice %363 {offsets = [0, 0], sizes = [2, 32], strides = [1, 1]} : vector<2x128xf32> to vector<2x32xf32>
    %365 = arith.negf %364 : vector<2x32xf32>
    %366 = math.exp %365 : vector<2x32xf32>
    %cst_99 = arith.constant 1.000000e+00 : f32
    %367 = vector.broadcast %cst_99 : f32 to vector<2x32xf32>
    %368 = arith.addf %367, %366 : vector<2x32xf32>
    %369 = arith.divf %367, %368 : vector<2x32xf32>
    %370 = vector.extract_strided_slice %363 {offsets = [0, 32], sizes = [2, 32], strides = [1, 1]} : vector<2x128xf32> to vector<2x32xf32>
    %371 = arith.negf %370 : vector<2x32xf32>
    %372 = math.exp %371 : vector<2x32xf32>
    %cst_100 = arith.constant 1.000000e+00 : f32
    %373 = vector.broadcast %cst_100 : f32 to vector<2x32xf32>
    %374 = arith.addf %373, %372 : vector<2x32xf32>
    %375 = arith.divf %373, %374 : vector<2x32xf32>
    %376 = vector.extract_strided_slice %363 {offsets = [0, 64], sizes = [2, 32], strides = [1, 1]} : vector<2x128xf32> to vector<2x32xf32>
    %377 = math.tanh %376 : vector<2x32xf32>
    %378 = vector.extract_strided_slice %363 {offsets = [0, 96], sizes = [2, 32], strides = [1, 1]} : vector<2x128xf32> to vector<2x32xf32>
    %379 = arith.negf %378 : vector<2x32xf32>
    %380 = math.exp %379 : vector<2x32xf32>
    %cst_101 = arith.constant 1.000000e+00 : f32
    %381 = vector.broadcast %cst_101 : f32 to vector<2x32xf32>
    %382 = arith.addf %381, %380 : vector<2x32xf32>
    %383 = arith.divf %381, %382 : vector<2x32xf32>
    %384 = arith.mulf %375, %322 : vector<2x32xf32>
    %385 = arith.mulf %369, %377 : vector<2x32xf32>
    %386 = arith.addf %384, %385 : vector<2x32xf32>
    %387 = math.tanh %386 : vector<2x32xf32>
    %388 = arith.mulf %383, %387 : vector<2x32xf32>
    %c5_102 = arith.constant 5 : index
    %c0_103 = arith.constant 0 : index
    %c0_104 = arith.constant 0 : index
    %389 = vector.load %arg9[%c5_102, %c0_103, %c0_104] : memref<8x2x32xf32, #tpu.memory_space<vmem>>, vector<1x2x32xf32>
    %390 = vector.shape_cast %389 : vector<1x2x32xf32> to vector<2x32xf32>
    %391 = vector.shape_cast %360 : vector<2x32xf32> to vector<1x2x32xf32>
    tpu.vector_store %arg9[%c5_102, %c0_103, %c0_104], %391 {strides = array<i32>} : memref<8x2x32xf32, #tpu.memory_space<vmem>>, vector<1x2x32xf32>,
    %c2_105 = arith.constant 2 : index
    %c0_106 = arith.constant 0 : index
    %c0_107 = arith.constant 0 : index
    %392 = vector.load %arg10[%c2_105, %c0_106, %c0_107] : memref<8x2x32xf32, #tpu.memory_space<vmem>>, vector<1x2x32xf32>
    %393 = vector.shape_cast %392 : vector<1x2x32xf32> to vector<2x32xf32>
    %394 = vector.shape_cast %388 : vector<2x32xf32> to vector<1x2x32xf32>
    tpu.vector_store %arg10[%c2_105, %c0_106, %c0_107], %394 {strides = array<i32>} : memref<8x2x32xf32, #tpu.memory_space<vmem>>, vector<1x2x32xf32>,
    %c12_108 = arith.constant 12 : index
    %c0_109 = arith.constant 0 : index
    %395 = vector.load %arg8[%c12_108, %c0_109] : memref<16x256xf32, #tpu.memory_space<vmem>>, vector<2x128xf32>
    %c2_110 = arith.constant 2 : index
    %c128_111 = arith.constant 128 : index
    %396 = vector.load %arg8[%c2_110, %c128_111] : memref<16x256xf32, #tpu.memory_space<vmem>>, vector<2x128xf32>
    %397 = arith.truncf %360 : vector<2x32xf32> to vector<2x32xbf16>
    %cst_112 = arith.constant dense<0.000000e+00> : vector<2x128xf32>
    %398 = tpu.matmul %397, %8, %cst_112 {dimension_numbers = #tpu.dot_dimension_numbers<[1], [0], [0], [1], [0, 0, 1, 1], [], []>} : vector<2x32xbf16>, vector<32x128xbf16>, vector<2x128xf32> -> vector<2x128xf32>
    %399 = arith.addf %395, %398 : vector<2x128xf32>
    %400 = vector.extract_strided_slice %399 {offsets = [0, 0], sizes = [2, 32], strides = [1, 1]} : vector<2x128xf32> to vector<2x32xf32>
    %401 = arith.negf %400 : vector<2x32xf32>
    %402 = math.exp %401 : vector<2x32xf32>
    %cst_113 = arith.constant 1.000000e+00 : f32
    %403 = vector.broadcast %cst_113 : f32 to vector<2x32xf32>
    %404 = arith.addf %403, %402 : vector<2x32xf32>
    %405 = arith.divf %403, %404 : vector<2x32xf32>
    %406 = vector.extract_strided_slice %399 {offsets = [0, 32], sizes = [2, 32], strides = [1, 1]} : vector<2x128xf32> to vector<2x32xf32>
    %407 = arith.negf %406 : vector<2x32xf32>
    %408 = math.exp %407 : vector<2x32xf32>
    %cst_114 = arith.constant 1.000000e+00 : f32
    %409 = vector.broadcast %cst_114 : f32 to vector<2x32xf32>
    %410 = arith.addf %409, %408 : vector<2x32xf32>
    %411 = arith.divf %409, %410 : vector<2x32xf32>
    %412 = vector.extract_strided_slice %399 {offsets = [0, 64], sizes = [2, 32], strides = [1, 1]} : vector<2x128xf32> to vector<2x32xf32>
    %413 = math.tanh %412 : vector<2x32xf32>
    %414 = vector.extract_strided_slice %399 {offsets = [0, 96], sizes = [2, 32], strides = [1, 1]} : vector<2x128xf32> to vector<2x32xf32>
    %415 = arith.negf %414 : vector<2x32xf32>
    %416 = math.exp %415 : vector<2x32xf32>
    %cst_115 = arith.constant 1.000000e+00 : f32
    %417 = vector.broadcast %cst_115 : f32 to vector<2x32xf32>
    %418 = arith.addf %417, %416 : vector<2x32xf32>
    %419 = arith.divf %417, %418 : vector<2x32xf32>
    %420 = arith.mulf %411, %358 : vector<2x32xf32>
    %421 = arith.mulf %405, %413 : vector<2x32xf32>
    %422 = arith.addf %420, %421 : vector<2x32xf32>
    %423 = math.tanh %422 : vector<2x32xf32>
    %424 = arith.mulf %419, %423 : vector<2x32xf32>
    %425 = arith.truncf %388 : vector<2x32xf32> to vector<2x32xbf16>
    %cst_116 = arith.constant dense<0.000000e+00> : vector<2x128xf32>
    %426 = tpu.matmul %425, %9, %cst_116 {dimension_numbers = #tpu.dot_dimension_numbers<[1], [0], [0], [1], [0, 0, 1, 1], [], []>} : vector<2x32xbf16>, vector<32x128xbf16>, vector<2x128xf32> -> vector<2x128xf32>
    %427 = arith.addf %396, %426 : vector<2x128xf32>
    %428 = vector.extract_strided_slice %427 {offsets = [0, 0], sizes = [2, 32], strides = [1, 1]} : vector<2x128xf32> to vector<2x32xf32>
    %429 = arith.negf %428 : vector<2x32xf32>
    %430 = math.exp %429 : vector<2x32xf32>
    %cst_117 = arith.constant 1.000000e+00 : f32
    %431 = vector.broadcast %cst_117 : f32 to vector<2x32xf32>
    %432 = arith.addf %431, %430 : vector<2x32xf32>
    %433 = arith.divf %431, %432 : vector<2x32xf32>
    %434 = vector.extract_strided_slice %427 {offsets = [0, 32], sizes = [2, 32], strides = [1, 1]} : vector<2x128xf32> to vector<2x32xf32>
    %435 = arith.negf %434 : vector<2x32xf32>
    %436 = math.exp %435 : vector<2x32xf32>
    %cst_118 = arith.constant 1.000000e+00 : f32
    %437 = vector.broadcast %cst_118 : f32 to vector<2x32xf32>
    %438 = arith.addf %437, %436 : vector<2x32xf32>
    %439 = arith.divf %437, %438 : vector<2x32xf32>
    %440 = vector.extract_strided_slice %427 {offsets = [0, 64], sizes = [2, 32], strides = [1, 1]} : vector<2x128xf32> to vector<2x32xf32>
    %441 = math.tanh %440 : vector<2x32xf32>
    %442 = vector.extract_strided_slice %427 {offsets = [0, 96], sizes = [2, 32], strides = [1, 1]} : vector<2x128xf32> to vector<2x32xf32>
    %443 = arith.negf %442 : vector<2x32xf32>
    %444 = math.exp %443 : vector<2x32xf32>
    %cst_119 = arith.constant 1.000000e+00 : f32
    %445 = vector.broadcast %cst_119 : f32 to vector<2x32xf32>
    %446 = arith.addf %445, %444 : vector<2x32xf32>
    %447 = arith.divf %445, %446 : vector<2x32xf32>
    %448 = arith.mulf %439, %386 : vector<2x32xf32>
    %449 = arith.mulf %433, %441 : vector<2x32xf32>
    %450 = arith.addf %448, %449 : vector<2x32xf32>
    %451 = math.tanh %450 : vector<2x32xf32>
    %452 = arith.mulf %447, %451 : vector<2x32xf32>
    %c6_120 = arith.constant 6 : index
    %c0_121 = arith.constant 0 : index
    %c0_122 = arith.constant 0 : index
    %453 = vector.load %arg9[%c6_120, %c0_121, %c0_122] : memref<8x2x32xf32, #tpu.memory_space<vmem>>, vector<1x2x32xf32>
    %454 = vector.shape_cast %453 : vector<1x2x32xf32> to vector<2x32xf32>
    %455 = vector.shape_cast %424 : vector<2x32xf32> to vector<1x2x32xf32>
    tpu.vector_store %arg9[%c6_120, %c0_121, %c0_122], %455 {strides = array<i32>} : memref<8x2x32xf32, #tpu.memory_space<vmem>>, vector<1x2x32xf32>,
    %c1_123 = arith.constant 1 : index
    %c0_124 = arith.constant 0 : index
    %c0_125 = arith.constant 0 : index
    %456 = vector.load %arg10[%c1_123, %c0_124, %c0_125] : memref<8x2x32xf32, #tpu.memory_space<vmem>>, vector<1x2x32xf32>
    %457 = vector.shape_cast %456 : vector<1x2x32xf32> to vector<2x32xf32>
    %458 = vector.shape_cast %452 : vector<2x32xf32> to vector<1x2x32xf32>
    tpu.vector_store %arg10[%c1_123, %c0_124, %c0_125], %458 {strides = array<i32>} : memref<8x2x32xf32, #tpu.memory_space<vmem>>, vector<1x2x32xf32>,
    %c14_126 = arith.constant 14 : index
    %c0_127 = arith.constant 0 : index
    %459 = vector.load %arg8[%c14_126, %c0_127] : memref<16x256xf32, #tpu.memory_space<vmem>>, vector<2x128xf32>
    %c0_128 = arith.constant 0 : index
    %c128_129 = arith.constant 128 : index
    %460 = vector.load %arg8[%c0_128, %c128_129] : memref<16x256xf32, #tpu.memory_space<vmem>>, vector<2x128xf32>
    %461 = arith.truncf %424 : vector<2x32xf32> to vector<2x32xbf16>
    %cst_130 = arith.constant dense<0.000000e+00> : vector<2x128xf32>
    %462 = tpu.matmul %461, %8, %cst_130 {dimension_numbers = #tpu.dot_dimension_numbers<[1], [0], [0], [1], [0, 0, 1, 1], [], []>} : vector<2x32xbf16>, vector<32x128xbf16>, vector<2x128xf32> -> vector<2x128xf32>
    %463 = arith.addf %459, %462 : vector<2x128xf32>
    %464 = vector.extract_strided_slice %463 {offsets = [0, 0], sizes = [2, 32], strides = [1, 1]} : vector<2x128xf32> to vector<2x32xf32>
    %465 = arith.negf %464 : vector<2x32xf32>
    %466 = math.exp %465 : vector<2x32xf32>
    %cst_131 = arith.constant 1.000000e+00 : f32
    %467 = vector.broadcast %cst_131 : f32 to vector<2x32xf32>
    %468 = arith.addf %467, %466 : vector<2x32xf32>
    %469 = arith.divf %467, %468 : vector<2x32xf32>
    %470 = vector.extract_strided_slice %463 {offsets = [0, 32], sizes = [2, 32], strides = [1, 1]} : vector<2x128xf32> to vector<2x32xf32>
    %471 = arith.negf %470 : vector<2x32xf32>
    %472 = math.exp %471 : vector<2x32xf32>
    %cst_132 = arith.constant 1.000000e+00 : f32
    %473 = vector.broadcast %cst_132 : f32 to vector<2x32xf32>
    %474 = arith.addf %473, %472 : vector<2x32xf32>
    %475 = arith.divf %473, %474 : vector<2x32xf32>
    %476 = vector.extract_strided_slice %463 {offsets = [0, 64], sizes = [2, 32], strides = [1, 1]} : vector<2x128xf32> to vector<2x32xf32>
    %477 = math.tanh %476 : vector<2x32xf32>
    %478 = vector.extract_strided_slice %463 {offsets = [0, 96], sizes = [2, 32], strides = [1, 1]} : vector<2x128xf32> to vector<2x32xf32>
    %479 = arith.negf %478 : vector<2x32xf32>
    %480 = math.exp %479 : vector<2x32xf32>
    %cst_133 = arith.constant 1.000000e+00 : f32
    %481 = vector.broadcast %cst_133 : f32 to vector<2x32xf32>
    %482 = arith.addf %481, %480 : vector<2x32xf32>
    %483 = arith.divf %481, %482 : vector<2x32xf32>
    %484 = arith.mulf %475, %422 : vector<2x32xf32>
    %485 = arith.mulf %469, %477 : vector<2x32xf32>
    %486 = arith.addf %484, %485 : vector<2x32xf32>
    %487 = math.tanh %486 : vector<2x32xf32>
    %488 = arith.mulf %483, %487 : vector<2x32xf32>
    %489 = arith.truncf %452 : vector<2x32xf32> to vector<2x32xbf16>
    %cst_134 = arith.constant dense<0.000000e+00> : vector<2x128xf32>
    %490 = tpu.matmul %489, %9, %cst_134 {dimension_numbers = #tpu.dot_dimension_numbers<[1], [0], [0], [1], [0, 0, 1, 1], [], []>} : vector<2x32xbf16>, vector<32x128xbf16>, vector<2x128xf32> -> vector<2x128xf32>
    %491 = arith.addf %460, %490 : vector<2x128xf32>
    %492 = vector.extract_strided_slice %491 {offsets = [0, 0], sizes = [2, 32], strides = [1, 1]} : vector<2x128xf32> to vector<2x32xf32>
    %493 = arith.negf %492 : vector<2x32xf32>
    %494 = math.exp %493 : vector<2x32xf32>
    %cst_135 = arith.constant 1.000000e+00 : f32
    %495 = vector.broadcast %cst_135 : f32 to vector<2x32xf32>
    %496 = arith.addf %495, %494 : vector<2x32xf32>
    %497 = arith.divf %495, %496 : vector<2x32xf32>
    %498 = vector.extract_strided_slice %491 {offsets = [0, 32], sizes = [2, 32], strides = [1, 1]} : vector<2x128xf32> to vector<2x32xf32>
    %499 = arith.negf %498 : vector<2x32xf32>
    %500 = math.exp %499 : vector<2x32xf32>
    %cst_136 = arith.constant 1.000000e+00 : f32
    %501 = vector.broadcast %cst_136 : f32 to vector<2x32xf32>
    %502 = arith.addf %501, %500 : vector<2x32xf32>
    %503 = arith.divf %501, %502 : vector<2x32xf32>
    %504 = vector.extract_strided_slice %491 {offsets = [0, 64], sizes = [2, 32], strides = [1, 1]} : vector<2x128xf32> to vector<2x32xf32>
    %505 = math.tanh %504 : vector<2x32xf32>
    %506 = vector.extract_strided_slice %491 {offsets = [0, 96], sizes = [2, 32], strides = [1, 1]} : vector<2x128xf32> to vector<2x32xf32>
    %507 = arith.negf %506 : vector<2x32xf32>
    %508 = math.exp %507 : vector<2x32xf32>
    %cst_137 = arith.constant 1.000000e+00 : f32
    %509 = vector.broadcast %cst_137 : f32 to vector<2x32xf32>
    %510 = arith.addf %509, %508 : vector<2x32xf32>
    %511 = arith.divf %509, %510 : vector<2x32xf32>
    %512 = arith.mulf %503, %450 : vector<2x32xf32>
    %513 = arith.mulf %497, %505 : vector<2x32xf32>
    %514 = arith.addf %512, %513 : vector<2x32xf32>
    %515 = math.tanh %514 : vector<2x32xf32>
    %516 = arith.mulf %511, %515 : vector<2x32xf32>
    %c7_138 = arith.constant 7 : index
    %c0_139 = arith.constant 0 : index
    %c0_140 = arith.constant 0 : index
    %517 = vector.load %arg9[%c7_138, %c0_139, %c0_140] : memref<8x2x32xf32, #tpu.memory_space<vmem>>, vector<1x2x32xf32>
    %518 = vector.shape_cast %517 : vector<1x2x32xf32> to vector<2x32xf32>
    %519 = vector.shape_cast %488 : vector<2x32xf32> to vector<1x2x32xf32>
    tpu.vector_store %arg9[%c7_138, %c0_139, %c0_140], %519 {strides = array<i32>} : memref<8x2x32xf32, #tpu.memory_space<vmem>>, vector<1x2x32xf32>,
    %c0_141 = arith.constant 0 : index
    %c0_142 = arith.constant 0 : index
    %c0_143 = arith.constant 0 : index
    %520 = vector.load %arg10[%c0_141, %c0_142, %c0_143] : memref<8x2x32xf32, #tpu.memory_space<vmem>>, vector<1x2x32xf32>
    %521 = vector.shape_cast %520 : vector<1x2x32xf32> to vector<2x32xf32>
    %522 = vector.shape_cast %516 : vector<2x32xf32> to vector<1x2x32xf32>
    tpu.vector_store %arg10[%c0_141, %c0_142, %c0_143], %522 {strides = array<i32>} : memref<8x2x32xf32, #tpu.memory_space<vmem>>, vector<1x2x32xf32>,
    %c0_144 = arith.constant 0 : index
    %c0_145 = arith.constant 0 : index
    %c0_146 = arith.constant 0 : index
    %523 = vector.load %arg9[%c0_144, %c0_145, %c0_146] : memref<8x2x32xf32, #tpu.memory_space<vmem>>, vector<8x2x32xf32>
    %c0_147 = arith.constant 0 : index
    %c0_148 = arith.constant 0 : index
    %c0_149 = arith.constant 0 : index
    %524 = vector.load %arg10[%c0_147, %c0_148, %c0_149] : memref<8x2x32xf32, #tpu.memory_space<vmem>>, vector<8x2x32xf32>
    %525 = arith.addf %523, %524 : vector<8x2x32xf32>
    %c0_150 = arith.constant 0 : index
    %c0_151 = arith.constant 0 : index
    %c0_152 = arith.constant 0 : index
    %526 = vector.load %arg5[%c0_150, %c0_151, %c0_152] : memref<8x2x32xf32, #tpu.memory_space<vmem>>, vector<8x2x32xf32>
    tpu.vector_store %arg5[%c0_150, %c0_151, %c0_152], %525 {strides = array<i32>} : memref<8x2x32xf32, #tpu.memory_space<vmem>>, vector<8x2x32xf32>,
    %527 = arith.addf %488, %516 : vector<2x32xf32>
    %c0_153 = arith.constant 0 : index
    %c0_154 = arith.constant 0 : index
    %c0_155 = arith.constant 0 : index
    %528 = vector.load %arg6[%c0_153, %c0_154, %c0_155] : memref<1x2x32xf32, #tpu.memory_space<vmem>>, vector<1x2x32xf32>
    %529 = vector.shape_cast %528 : vector<1x2x32xf32> to vector<2x32xf32>
    %530 = vector.shape_cast %527 : vector<2x32xf32> to vector<1x2x32xf32>
    tpu.vector_store %arg6[%c0_153, %c0_154, %c0_155], %530 {strides = array<i32>} : memref<1x2x32xf32, #tpu.memory_space<vmem>>, vector<1x2x32xf32>,
    %531 = arith.addf %486, %514 : vector<2x32xf32>
    %c0_156 = arith.constant 0 : index
    %c0_157 = arith.constant 0 : index
    %c0_158 = arith.constant 0 : index
    %532 = vector.load %arg7[%c0_156, %c0_157, %c0_158] : memref<1x2x32xf32, #tpu.memory_space<vmem>>, vector<1x2x32xf32>
    %533 = vector.shape_cast %532 : vector<1x2x32xf32> to vector<2x32xf32>
    %534 = vector.shape_cast %531 : vector<2x32xf32> to vector<1x2x32xf32>
    tpu.vector_store %arg7[%c0_156, %c0_157, %c0_158], %534 {strides = array<i32>} : memref<1x2x32xf32, #tpu.memory_space<vmem>>, vector<1x2x32xf32>,
    return
  }
}

</mosaic_0001>

<llo_original>
// kernel: tpu_custom_call.1
$region0: #{tpu_custom_call.1}
  #allocation0 [shape = 'u32[]', space=smem, size = 0x4, offset = 0x4, fixed_abs, tag = 'smem constant byte address 0x4 - core index']
  #allocation1 [shape = 'u32[144,128]{1,0:T(1,128)}', space=vmem, size = 0x12000, scoped, tag = 'internal scratch']
  #allocation2 [shape = 'f32[16,256]{1,0:T(8,128)}', space=vmem, size = 0x4000, scoped, tag = 'scratch operand']
  #allocation3 [shape = 'f32[8,2,32]{2,1,0:T(2,128)}', space=vmem, size = 0x2000, scoped, tag = 'scratch operand']
  #allocation4 [shape = 'f32[8,2,32]{2,1,0:T(2,128)}', space=vmem, size = 0x2000, scoped, tag = 'scratch operand']
  %s0 = inlined_call_operand.hbm [shape: f32[16,32], index: 0, kind: input, shape index: {}]
  %s1 = inlined_call_operand.hbm [shape: bf16[32,256], index: 1, kind: input, shape index: {}]
  %s2 = inlined_call_operand.vmem [shape: f32[1,256], index: 2, kind: input, shape index: {}]
  %s3 = inlined_call_operand.hbm [shape: bf16[32,128], index: 3, kind: input, shape index: {}]
  %s4 = inlined_call_operand.hbm [shape: bf16[32,128], index: 4, kind: input, shape index: {}]
  %s5 = inlined_call_operand.hbm [shape: f32[8,2,32], index: 5, kind: output, shape index: {0}]
  %s6 = inlined_call_operand.hbm [shape: f32[1,2,32], index: 6, kind: output, shape index: {1}]
  %s7 = inlined_call_operand.hbm [shape: f32[1,2,32], index: 7, kind: output, shape index: {2}]
  %8 = xla_tuple %s5, %s6, %s7
  %s9 = sld [smem:[#allocation0]]
  $region62: #{tpu_custom_call.1} parent=0
    _
  %s11 = ssub.s32 1, %s9
  %s12 = scalar_select 0, %s11, %s9
  $region1: #{tpu_custom_call.1} parent=0
    #allocation5 [shape = 'u8[8192]{0}', space=vmem, size = 0x2000, scoped, tag = 'input window, operand 0, single buffered']
    #allocation6 [shape = 's32[1]{0}', space=sflag, size = 0x4, scoped, tag = 'scoped memory for tpu_custom_call.1']
    #allocation7 [shape = 's32[1]{0}', space=sflag, size = 0x4, scoped, tag = 'scoped memory for tpu_custom_call.1']
    #allocation8 [shape = 'u8[16384]{0}', space=vmem, size = 0x4000, scoped, tag = 'input window, operand 1, single buffered']
    #allocation9 [shape = 's32[1]{0}', space=sflag, size = 0x4, scoped, tag = 'scoped memory for tpu_custom_call.1']
    #allocation10 [shape = 'u8[8192]{0}', space=vmem, size = 0x2000, scoped, tag = 'input window, operand 3, single buffered']
    #allocation11 [shape = 'u8[8192]{0}', space=vmem, size = 0x2000, scoped, tag = 'input window, operand 4, single buffered']
    #allocation12 [shape = 's32[1]{0}', space=sflag, size = 0x4, scoped, tag = 'scoped memory for tpu_custom_call.1']
    #allocation13 [shape = 'u8[8192]{0}', space=vmem, size = 0x2000, scoped, tag = 'output window, operand 0, single buffered']
    #allocation14 [shape = 'u8[1024]{0}', space=vmem, size = 0x400, scoped, tag = 'output window, operand 1, single buffered']
    #allocation15 [shape = 's32[1]{0}', space=sflag, size = 0x4, scoped, tag = 'scoped memory for tpu_custom_call.1']
    #allocation16 [shape = 'u8[1024]{0}', space=vmem, size = 0x400, scoped, tag = 'output window, operand 2, single buffered']
    %13 = vsyncpa [#allocation6], 0
    %14 = vsyncpa [#allocation9], 0
    %15 = vsyncpa [#allocation12], 0
    %16 = vsyncpa [#allocation7], 0
    %17 = vsyncpa [#allocation15], 0
    // Predicated region
    $region2: #{tpu_custom_call.1} parent=1 // pred_check
      _
    $region3: #{tpu_custom_call.1} parent=1 // pred_check_branch
      %19 = sbr.rel (0) target = $region5
    $region4: #{tpu_custom_call.1} parent=1 // pred_region
      %s21 = ssub.s32 256, 256
      %22 = vsyncadd [#allocation6], %s21
      %s23 = sshll.u32 [#allocation5], 4
      %s24 = int_to_ptr.vmem [resolvable:$true] %s23
      %29 = dma.hbm_to_vmem [thread:$0]  %s0, 256, %s24, [#allocation6], 128, 128, 8
    $region5: #{tpu_custom_call.1} parent=1 // pred_fallthru
      _
    // Predicated region
    $region6: #{tpu_custom_call.1} parent=1 // pred_check
      _
    $region7: #{tpu_custom_call.1} parent=1 // pred_check_branch
      %31 = sbr.rel (0) target = $region9
    $region8: #{tpu_custom_call.1} parent=1 // pred_region
      %s33 = ssub.s32 512, 512
      %34 = vsyncadd [#allocation9], %s33
      %s35 = sshll.u32 [#allocation8], 4
      %s36 = int_to_ptr.vmem [resolvable:$true] %s35
      %41 = dma.hbm_to_vmem [thread:$0]  %s1, 512, %s36, [#allocation9], 128, 128, 8
    $region9: #{tpu_custom_call.1} parent=1 // pred_fallthru
      _
    // Predicated region
    $region10: #{tpu_custom_call.1} parent=1 // pred_check
      _
    $region11: #{tpu_custom_call.1} parent=1 // pred_check_branch
      %43 = sbr.rel (0) target = $region13
    $region12: #{tpu_custom_call.1} parent=1 // pred_region
      _
    $region13: #{tpu_custom_call.1} parent=1 // pred_fallthru
      _
    // Predicated region
    $region14: #{tpu_custom_call.1} parent=1 // pred_check
      _
    $region15: #{tpu_custom_call.1} parent=1 // pred_check_branch
      %45 = sbr.rel (0) target = $region17
    $region16: #{tpu_custom_call.1} parent=1 // pred_region
      %s47 = ssub.s32 256, 256
      %48 = vsyncadd [#allocation9], %s47
      %s49 = sshll.u32 [#allocation10], 4
      %s50 = int_to_ptr.vmem [resolvable:$true] %s49
      %55 = dma.hbm_to_vmem [thread:$0]  %s3, 256, %s50, [#allocation9], 64, 64, 4
    $region17: #{tpu_custom_call.1} parent=1 // pred_fallthru
      _
    // Predicated region
    $region18: #{tpu_custom_call.1} parent=1 // pred_check
      _
    $region19: #{tpu_custom_call.1} parent=1 // pred_check_branch
      %57 = sbr.rel (0) target = $region21
    $region20: #{tpu_custom_call.1} parent=1 // pred_region
      %s59 = ssub.s32 256, 256
      %60 = vsyncadd [#allocation12], %s59
      %s61 = sshll.u32 [#allocation11], 4
      %s62 = int_to_ptr.vmem [resolvable:$true] %s61
      %67 = dma.hbm_to_vmem [thread:$0]  %s4, 256, %s62, [#allocation12], 64, 64, 4
    $region21: #{tpu_custom_call.1} parent=1 // pred_fallthru
      _
    // Predicated region
    $region22: #{tpu_custom_call.1} parent=1 // pred_check
      _
    $region23: #{tpu_custom_call.1} parent=1 // pred_check_branch
      %69 = sbr.rel (0) target = $region25
    $region24: #{tpu_custom_call.1} parent=1 // pred_region
      %70 = dma.done [#allocation6], 256
    $region25: #{tpu_custom_call.1} parent=1 // pred_fallthru
      _
    // Predicated region
    $region26: #{tpu_custom_call.1} parent=1 // pred_check
      _
    $region27: #{tpu_custom_call.1} parent=1 // pred_check_branch
      %72 = sbr.rel (0) target = $region29
    $region28: #{tpu_custom_call.1} parent=1 // pred_region
      %73 = dma.done [#allocation9], 512
    $region29: #{tpu_custom_call.1} parent=1 // pred_fallthru
      _
    // Predicated region
    $region30: #{tpu_custom_call.1} parent=1 // pred_check
      _
    $region31: #{tpu_custom_call.1} parent=1 // pred_check_branch
      %75 = sbr.rel (0) target = $region33
    $region32: #{tpu_custom_call.1} parent=1 // pred_region
      %76 = dma.done [#allocation9], 256
    $region33: #{tpu_custom_call.1} parent=1 // pred_fallthru
      _
    // Predicated region
    $region34: #{tpu_custom_call.1} parent=1 // pred_check
      _
    $region35: #{tpu_custom_call.1} parent=1 // pred_check_branch
      %78 = sbr.rel (0) target = $region37
    $region36: #{tpu_custom_call.1} parent=1 // pred_region
      %79 = dma.done [#allocation12], 256
    $region37: #{tpu_custom_call.1} parent=1 // pred_fallthru
      _
    %v81 = vld [vmem:[#allocation5] sm:$0xff]
    %v82 = vld [vmem:[#allocation5 + $0x8] sm:$0xff]
    %v83 = vpack.c.bf16 %v82, %v81
    %v84 = vld [vmem:[#allocation8] sm:$0xff]
    %v85 = vld [vmem:[#allocation8 + $0x8] sm:$0xff]
    %v86 = vld [vmem:[#allocation8 + $0x10] sm:$0xff]
    %v87 = vld [vmem:[#allocation8 + $0x18] sm:$0xff]
    %v88 = vld [vmem:[%s2] sm:$0x3]
    %v90 = vlaneseq
    %v91 = vshrl.u32 %v90, 7
    %v92 = vsub.s32 0, %v91
    %v93 = vrot.slane %v88, %v92
    %v94 = vlaneseq
    %v95 = vshrl.u32 %v94, 7
    %v96 = vsub.s32 1, %v95
    %v97 = vrot.slane %v88, %v96
    %v104 = vunpack.c.l.b16 %v84
    %v105 = vunpack.c.h.b16 %v84
    %v106 = vunpack.c.l.b16 %v85
    %v107 = vunpack.c.h.b16 %v85
    %v108 = vunpack.c.l.b16 %v86
    %v109 = vunpack.c.h.b16 %v86
    %v110 = vunpack.c.l.b16 %v87
    %v111 = vunpack.c.h.b16 %v87
    %v112 = vpack.c.b16 %v106, %v104
    %v113 = vpack.c.b16 %v107, %v105
    %v114 = vpack.c.b16 %v110, %v108
    %v115 = vpack.c.b16 %v111, %v109
    %vm120 = vcmask 261120
    %v122 = vsel %vm120, %v83, 0
    %124 = vmatprep.subr.bf16.mxu0 %v113
    %125 = vmatpush1.bf16.msra.mxu0 %v112
    %126 = vmatprep.subr.bf16.mxu0 %v115
    %127 = vmatpush1.bf16.msra.mxu0 %v114
    %128 = vmatprep.subr.bf16.mxu0 0
    %129 = vmatpush1.bf16.msra.mxu0 0
    %130 = vmatprep.subr.bf16.mxu0 0
    %131 = vmatpush1.bf16.msra.mxu0 0
    %132 = vmatprep.subr.bf16.mxu0 0
    %133 = vmatpush1.bf16.msra.mxu0 0
    %134 = vmatprep.subr.bf16.mxu0 0
    %135 = vmatpush1.bf16.msra.mxu0 0
    %136 = vmatprep.subr.bf16.mxu0 0
    %137 = vmatpush1.bf16.msra.mxu0 0
    %138 = vmatprep.subr.bf16.mxu0 0
    %139 = vmatpush1.bf16.msra.mxu0 0
    %140 = vmatprep.subr.bf16.mxu0 0
    %141 = vmatpush1.bf16.msra.mxu0 0
    %142 = vmatprep.subr.bf16.mxu0 0
    %143 = vmatpush1.bf16.msra.mxu0 0
    %144 = vmatprep.subr.bf16.mxu0 0
    %145 = vmatpush1.bf16.msra.mxu0 0
    %146 = vmatprep.subr.bf16.mxu0 0
    %147 = vmatpush1.bf16.msra.mxu0 0
    %148 = vmatprep.subr.bf16.mxu0 0
    %149 = vmatpush1.bf16.msra.mxu0 0
    %150 = vmatprep.subr.bf16.mxu0 0
    %151 = vmatpush1.bf16.msra.mxu0 0
    %152 = vmatprep.subr.bf16.mxu0 0
    %153 = vmatpush1.bf16.msra.mxu0 0
    %154 = vmatprep.subr.bf16.mxu0 0
    %155 = vmatpush1.bf16.msra.mxu0 0
    %156 = vmatprep.mubr.bf16.mxu0 0
    %157 = vmatmul.mubr.bf16.gmra.mrb[0].mxu0 %v122
    %v158 = vpop.f32.mrb[0].mxu0
    %v159 = vadd.f32 %v93, %v158
    %v160 = vpop.f32.mrb[0].mxu0
    %v161 = vadd.f32 %v97, %v160
    %v162 = vpop.f32.mrb[0].mxu0
    %v163 = vadd.f32 %v93, %v162
    %v164 = vpop.f32.mrb[0].mxu0
    %v165 = vadd.f32 %v97, %v164
    %166 = vdwg.mxu0
    %167 = vst [vmem:[#allocation2] sm:$0xff] %v159
    %168 = vst [vmem:[#allocation2 + $0x8] sm:$0xff] %v161
    %169 = vst [vmem:[#allocation2 + $0x10] sm:$0xff] %v163
    %170 = vst [vmem:[#allocation2 + $0x18] sm:$0xff] %v165
    %v171 = vld [vmem:[#allocation10] sm:$0xf]
    %v172 = vld [vmem:[#allocation10 + $0x4] sm:$0xf]
    %v173 = vld [vmem:[#allocation10 + $0x8] sm:$0xf]
    %v174 = vld [vmem:[#allocation10 + $0xc] sm:$0xf]
    %v175 = vld [vmem:[#allocation11] sm:$0xf]
    %v176 = vld [vmem:[#allocation11 + $0x4] sm:$0xf]
    %v177 = vld [vmem:[#allocation11 + $0x8] sm:$0xf]
    %v178 = vld [vmem:[#allocation11 + $0xc] sm:$0xf]
    %v179 = vld [vmem:[#allocation2] sm:$0x3]
    %v180 = vld [vmem:[#allocation2 + $0x18] sm:$0xc0]
    %v185 = vunpack.c.l.b16 %v171
    %v186 = vunpack.c.l.b16 %v172
    %v187 = vunpack.c.l.b16 %v173
    %v188 = vunpack.c.l.b16 %v174
    %v189 = vpack.c.b16 %v186, %v185
    %v190 = vpack.c.b16 %v188, %v187
    %v194 = vsel %vm120, 0, 0
    %196 = vmatprep.subr.bf16.mxu0 0
    %197 = vmatpush1.bf16.msra.mxu0 %v189
    %198 = vmatprep.subr.bf16.mxu0 0
    %199 = vmatpush1.bf16.msra.mxu0 %v190
    %200 = vmatprep.subr.bf16.mxu0 0
    %201 = vmatpush1.bf16.msra.mxu0 0
    %202 = vmatprep.subr.bf16.mxu0 0
    %203 = vmatpush1.bf16.msra.mxu0 0
    %204 = vmatprep.subr.bf16.mxu0 0
    %205 = vmatpush1.bf16.msra.mxu0 0
    %206 = vmatprep.subr.bf16.mxu0 0
    %207 = vmatpush1.bf16.msra.mxu0 0
    %208 = vmatprep.subr.bf16.mxu0 0
    %209 = vmatpush1.bf16.msra.mxu0 0
    %210 = vmatprep.subr.bf16.mxu0 0
    %211 = vmatpush1.bf16.msra.mxu0 0
    %212 = vmatprep.subr.bf16.mxu0 0
    %213 = vmatpush1.bf16.msra.mxu0 0
    %214 = vmatprep.subr.bf16.mxu0 0
    %215 = vmatpush1.bf16.msra.mxu0 0
    %216 = vmatprep.subr.bf16.mxu0 0
    %217 = vmatpush1.bf16.msra.mxu0 0
    %218 = vmatprep.subr.bf16.mxu0 0
    %219 = vmatpush1.bf16.msra.mxu0 0
    %220 = vmatprep.subr.bf16.mxu0 0
    %221 = vmatpush1.bf16.msra.mxu0 0
    %222 = vmatprep.subr.bf16.mxu0 0
    %223 = vmatpush1.bf16.msra.mxu0 0
    %224 = vmatprep.subr.bf16.mxu0 0
    %225 = vmatpush1.bf16.msra.mxu0 0
    %226 = vmatprep.subr.bf16.mxu0 0
    %227 = vmatpush1.bf16.msra.mxu0 0
    %228 = vmatprep.mubr.bf16.mxu0 0
    %229 = vmatmul.mubr.bf16.gmra.mrb[0].mxu0 %v194
    %v230 = vpop.f32.mrb[0].mxu0
    %v231 = vadd.f32 0.0, %v230
    %v232 = vpop.f32.mrb[0].mxu0
    %v233 = vpop.f32.mrb[0].mxu0
    %v234 = vpop.f32.mrb[0].mxu0
    %235 = vdwg.mxu0
    %v236 = vadd.f32 %v179, %v231
    %v237 = vxor.u32 %v236, 2147483648
    %v238 = vmul.f32 %v237, 1.442695
    %v239 = vpow.pop %v238
    %v240 = vadd.f32 %v239, 1.0
    %v241 = vrcp.pop %v240
    %v242 = vmul.f32 1.0, %v241
    %v243 = vtanh.pop %v236
    %v244 = vmul.f32 %v242, 0.0
    %246 = vrot.lane.b32.xlu0 %v243, 64
    %v247 = vpop.permute.xlu0 %246
    %v249 = vmul.f32 %v242, %v247
    %251 = vrot.lane.b32.xlu0 %v249, 32
    %v252 = vpop.permute.xlu0 %251
    %v254 = vadd.f32 %v244, %v252
    %v255 = vtanh.pop %v254
    %257 = vrot.lane.b32.xlu0 %v255, 64
    %v258 = vpop.permute.xlu0 %257
    %v260 = vmul.f32 %v242, %v258
    %v265 = vunpack.c.l.b16 %v175
    %v266 = vunpack.c.l.b16 %v176
    %v267 = vunpack.c.l.b16 %v177
    %v268 = vunpack.c.l.b16 %v178
    %v269 = vpack.c.b16 %v266, %v265
    %v270 = vpack.c.b16 %v268, %v267
    %273 = vmatprep.subr.bf16.mxu0 0
    %274 = vmatpush1.bf16.msra.mxu0 %v269
    %275 = vmatprep.subr.bf16.mxu0 0
    %276 = vmatpush1.bf16.msra.mxu0 %v270
    %277 = vmatprep.subr.bf16.mxu0 0
    %278 = vmatpush1.bf16.msra.mxu0 0
    %279 = vmatprep.subr.bf16.mxu0 0
    %280 = vmatpush1.bf16.msra.mxu0 0
    %281 = vmatprep.subr.bf16.mxu0 0
    %282 = vmatpush1.bf16.msra.mxu0 0
    %283 = vmatprep.subr.bf16.mxu0 0
    %284 = vmatpush1.bf16.msra.mxu0 0
    %285 = vmatprep.subr.bf16.mxu0 0
    %286 = vmatpush1.bf16.msra.mxu0 0
    %287 = vmatprep.subr.bf16.mxu0 0
    %288 = vmatpush1.bf16.msra.mxu0 0
    %289 = vmatprep.subr.bf16.mxu0 0
    %290 = vmatpush1.bf16.msra.mxu0 0
    %291 = vmatprep.subr.bf16.mxu0 0
    %292 = vmatpush1.bf16.msra.mxu0 0
    %293 = vmatprep.subr.bf16.mxu0 0
    %294 = vmatpush1.bf16.msra.mxu0 0
    %295 = vmatprep.subr.bf16.mxu0 0
    %296 = vmatpush1.bf16.msra.mxu0 0
    %297 = vmatprep.subr.bf16.mxu0 0
    %298 = vmatpush1.bf16.msra.mxu0 0
    %299 = vmatprep.subr.bf16.mxu0 0
    %300 = vmatpush1.bf16.msra.mxu0 0
    %301 = vmatprep.subr.bf16.mxu0 0
    %302 = vmatpush1.bf16.msra.mxu0 0
    %303 = vmatprep.subr.bf16.mxu0 0
    %304 = vmatpush1.bf16.msra.mxu0 0
    %305 = vmatprep.mubr.bf16.mxu0 0
    %306 = vmatmul.mubr.bf16.gmra.mrb[0].mxu0 %v194
    %v307 = vpop.f32.mrb[0].mxu0
    %v308 = vadd.f32 0.0, %v307
    %v309 = vpop.f32.mrb[0].mxu0
    %v310 = vpop.f32.mrb[0].mxu0
    %v311 = vpop.f32.mrb[0].mxu0
    %312 = vdwg.mxu0
    %v314 = vrot.slane %v308, 2
    %v316 = vadd.f32 %v180, %v314
    %v317 = vxor.u32 %v316, 2147483648
    %v318 = vmul.f32 %v317, 1.442695
    %v319 = vpow.pop %v318
    %v320 = vadd.f32 %v319, 1.0
    %v321 = vrcp.pop %v320
    %v322 = vmul.f32 1.0, %v321
    %v323 = vtanh.pop %v316
    %v324 = vmul.f32 %v322, 0.0
    %326 = vrot.lane.b32.xlu0 %v323, 64
    %v327 = vpop.permute.xlu0 %326
    %v329 = vmul.f32 %v322, %v327
    %331 = vrot.lane.b32.xlu0 %v329, 32
    %v332 = vpop.permute.xlu0 %331
    %v334 = vadd.f32 %v324, %v332
    %v335 = vtanh.pop %v334
    %337 = vrot.lane.b32.xlu0 %v335, 64
    %v338 = vpop.permute.xlu0 %337
    %v340 = vmul.f32 %v322, %v338
    %342 = vrot.lane.b32.xlu0 %v260, 32
    %v343 = vpop.permute.xlu0 %342
    %vm345 = vcmask 254976
    %346 = vst.msk [vmem:[#allocation3] sm:$0x3] %vm345, %v343
    %348 = vrot.lane.b32.xlu0 %v340, 32
    %v349 = vpop.permute.xlu0 %348
    %s351 = scalar_lea.vmem [#allocation4], 14
    %vm352 = vcmask 261126
    %353 = vst.msk [vmem:[%s351 - $0x6] sm:$0xc0] %vm352, %v349
    %v354 = vld [vmem:[#allocation2] sm:$0xc]
    %v355 = vld [vmem:[#allocation2 + $0x18] sm:$0x30]
    %v356 = vpack.c.bf16 %v260, %v260
    %358 = vrot.lane.b32.xlu0 %v356, 32
    %v359 = vpop.permute.xlu0 %358
    %v361 = vsel %vm120, %v359, 0
    %363 = vmatprep.subr.bf16.mxu0 0
    %364 = vmatpush1.bf16.msra.mxu0 %v189
    %365 = vmatprep.subr.bf16.mxu0 0
    %366 = vmatpush1.bf16.msra.mxu0 %v190
    %367 = vmatprep.subr.bf16.mxu0 0
    %368 = vmatpush1.bf16.msra.mxu0 0
    %369 = vmatprep.subr.bf16.mxu0 0
    %370 = vmatpush1.bf16.msra.mxu0 0
    %371 = vmatprep.subr.bf16.mxu0 0
    %372 = vmatpush1.bf16.msra.mxu0 0
    %373 = vmatprep.subr.bf16.mxu0 0
    %374 = vmatpush1.bf16.msra.mxu0 0
    %375 = vmatprep.subr.bf16.mxu0 0
    %376 = vmatpush1.bf16.msra.mxu0 0
    %377 = vmatprep.subr.bf16.mxu0 0
    %378 = vmatpush1.bf16.msra.mxu0 0
    %379 = vmatprep.subr.bf16.mxu0 0
    %380 = vmatpush1.bf16.msra.mxu0 0
    %381 = vmatprep.subr.bf16.mxu0 0
    %382 = vmatpush1.bf16.msra.mxu0 0
    %383 = vmatprep.subr.bf16.mxu0 0
    %384 = vmatpush1.bf16.msra.mxu0 0
    %385 = vmatprep.subr.bf16.mxu0 0
    %386 = vmatpush1.bf16.msra.mxu0 0
    %387 = vmatprep.subr.bf16.mxu0 0
    %388 = vmatpush1.bf16.msra.mxu0 0
    %389 = vmatprep.subr.bf16.mxu0 0
    %390 = vmatpush1.bf16.msra.mxu0 0
    %391 = vmatprep.subr.bf16.mxu0 0
    %392 = vmatpush1.bf16.msra.mxu0 0
    %393 = vmatprep.subr.bf16.mxu0 0
    %394 = vmatpush1.bf16.msra.mxu0 0
    %395 = vmatprep.mubr.bf16.mxu0 0
    %396 = vmatmul.mubr.bf16.gmra.mrb[0].mxu0 %v361
    %v397 = vpop.f32.mrb[0].mxu0
    %v398 = vadd.f32 0.0, %v397
    %v399 = vpop.f32.mrb[0].mxu0
    %v400 = vpop.f32.mrb[0].mxu0
    %v401 = vpop.f32.mrb[0].mxu0
    %402 = vdwg.mxu0
    %v404 = vrot.slane %v398, 6
    %v406 = vadd.f32 %v354, %v404
    %v407 = vxor.u32 %v406, 2147483648
    %v408 = vmul.f32 %v407, 1.442695
    %v409 = vpow.pop %v408
    %v410 = vadd.f32 %v409, 1.0
    %v411 = vrcp.pop %v410
    %v412 = vmul.f32 1.0, %v411
    %v413 = vtanh.pop %v406
    %v415 = vrot.slane %v254, 6
    %v417 = vmul.f32 %v412, %v415
    %419 = vrot.lane.b32.xlu0 %v413, 64
    %v420 = vpop.permute.xlu0 %419
    %v422 = vmul.f32 %v412, %v420
    %424 = vrot.lane.b32.xlu0 %v422, 32
    %v425 = vpop.permute.xlu0 %424
    %v427 = vadd.f32 %v417, %v425
    %v428 = vtanh.pop %v427
    %430 = vrot.lane.b32.xlu0 %v428, 64
    %v431 = vpop.permute.xlu0 %430
    %v433 = vmul.f32 %v412, %v431
    %v434 = vpack.c.bf16 %v340, %v340
    %v436 = vrot.slane %v434, 3
    %437 = vrot.lane.b32.xlu0 %v436, 32
    %v438 = vpop.permute.xlu0 %437
    %v440 = vsel %vm120, %v438, 0
    %442 = vmatprep.subr.bf16.mxu0 0
    %443 = vmatpush1.bf16.msra.mxu0 %v269
    %444 = vmatprep.subr.bf16.mxu0 0
    %445 = vmatpush1.bf16.msra.mxu0 %v270
    %446 = vmatprep.subr.bf16.mxu0 0
    %447 = vmatpush1.bf16.msra.mxu0 0
    %448 = vmatprep.subr.bf16.mxu0 0
    %449 = vmatpush1.bf16.msra.mxu0 0
    %450 = vmatprep.subr.bf16.mxu0 0
    %451 = vmatpush1.bf16.msra.mxu0 0
    %452 = vmatprep.subr.bf16.mxu0 0
    %453 = vmatpush1.bf16.msra.mxu0 0
    %454 = vmatprep.subr.bf16.mxu0 0
    %455 = vmatpush1.bf16.msra.mxu0 0
    %456 = vmatprep.subr.bf16.mxu0 0
    %457 = vmatpush1.bf16.msra.mxu0 0
    %458 = vmatprep.subr.bf16.mxu0 0
    %459 = vmatpush1.bf16.msra.mxu0 0
    %460 = vmatprep.subr.bf16.mxu0 0
    %461 = vmatpush1.bf16.msra.mxu0 0
    %462 = vmatprep.subr.bf16.mxu0 0
    %463 = vmatpush1.bf16.msra.mxu0 0
    %464 = vmatprep.subr.bf16.mxu0 0
    %465 = vmatpush1.bf16.msra.mxu0 0
    %466 = vmatprep.subr.bf16.mxu0 0
    %467 = vmatpush1.bf16.msra.mxu0 0
    %468 = vmatprep.subr.bf16.mxu0 0
    %469 = vmatpush1.bf16.msra.mxu0 0
    %470 = vmatprep.subr.bf16.mxu0 0
    %471 = vmatpush1.bf16.msra.mxu0 0
    %472 = vmatprep.subr.bf16.mxu0 0
    %473 = vmatpush1.bf16.msra.mxu0 0
    %474 = vmatprep.mubr.bf16.mxu0 0
    %475 = vmatmul.mubr.bf16.gmra.mrb[0].mxu0 %v440
    %v476 = vpop.f32.mrb[0].mxu0
    %v477 = vadd.f32 0.0, %v476
    %v478 = vpop.f32.mrb[0].mxu0
    %v479 = vpop.f32.mrb[0].mxu0
    %v480 = vpop.f32.mrb[0].mxu0
    %481 = vdwg.mxu0
    %v483 = vrot.slane %v477, 4
    %v485 = vadd.f32 %v355, %v483
    %v486 = vxor.u32 %v485, 2147483648
    %v487 = vmul.f32 %v486, 1.442695
    %v488 = vpow.pop %v487
    %v489 = vadd.f32 %v488, 1.0
    %v490 = vrcp.pop %v489
    %v491 = vmul.f32 1.0, %v490
    %v492 = vtanh.pop %v485
    %v494 = vrot.slane %v334, 2
    %v496 = vmul.f32 %v491, %v494
    %498 = vrot.lane.b32.xlu0 %v492, 64
    %v499 = vpop.permute.xlu0 %498
    %v501 = vmul.f32 %v491, %v499
    %503 = vrot.lane.b32.xlu0 %v501, 32
    %v504 = vpop.permute.xlu0 %503
    %v506 = vadd.f32 %v496, %v504
    %v507 = vtanh.pop %v506
    %509 = vrot.lane.b32.xlu0 %v507, 64
    %v510 = vpop.permute.xlu0 %509
    %v512 = vmul.f32 %v491, %v510
    %514 = vrot.lane.b32.xlu0 %v433, 32
    %v515 = vpop.permute.xlu0 %514
    %s517 = scalar_lea.vmem [#allocation3], 2
    %vm518 = vcmask 257026
    %519 = vst.msk [vmem:[%s517 - $0x2] sm:$0xc] %vm518, %v515
    %521 = vrot.lane.b32.xlu0 %v512, 32
    %v522 = vpop.permute.xlu0 %521
    %s524 = scalar_lea.vmem [#allocation4], 12
    %vm525 = vcmask 259076
    %526 = vst.msk [vmem:[%s524 - $0x4] sm:$0x30] %vm525, %v522
    %v527 = vld [vmem:[#allocation2] sm:$0x30]
    %v528 = vld [vmem:[#allocation2 + $0x18] sm:$0xc]
    %v529 = vpack.c.bf16 %v433, %v433
    %v531 = vrot.slane %v529, 1
    %532 = vrot.lane.b32.xlu0 %v531, 32
    %v533 = vpop.permute.xlu0 %532
    %v535 = vsel %vm120, %v533, 0
    %537 = vmatprep.subr.bf16.mxu0 0
    %538 = vmatpush1.bf16.msra.mxu0 %v189
    %539 = vmatprep.subr.bf16.mxu0 0
    %540 = vmatpush1.bf16.msra.mxu0 %v190
    %541 = vmatprep.subr.bf16.mxu0 0
    %542 = vmatpush1.bf16.msra.mxu0 0
    %543 = vmatprep.subr.bf16.mxu0 0
    %544 = vmatpush1.bf16.msra.mxu0 0
    %545 = vmatprep.subr.bf16.mxu0 0
    %546 = vmatpush1.bf16.msra.mxu0 0
    %547 = vmatprep.subr.bf16.mxu0 0
    %548 = vmatpush1.bf16.msra.mxu0 0
    %549 = vmatprep.subr.bf16.mxu0 0
    %550 = vmatpush1.bf16.msra.mxu0 0
    %551 = vmatprep.subr.bf16.mxu0 0
    %552 = vmatpush1.bf16.msra.mxu0 0
    %553 = vmatprep.subr.bf16.mxu0 0
    %554 = vmatpush1.bf16.msra.mxu0 0
    %555 = vmatprep.subr.bf16.mxu0 0
    %556 = vmatpush1.bf16.msra.mxu0 0
    %557 = vmatprep.subr.bf16.mxu0 0
    %558 = vmatpush1.bf16.msra.mxu0 0
    %559 = vmatprep.subr.bf16.mxu0 0
    %560 = vmatpush1.bf16.msra.mxu0 0
    %561 = vmatprep.subr.bf16.mxu0 0
    %562 = vmatpush1.bf16.msra.mxu0 0
    %563 = vmatprep.subr.bf16.mxu0 0
    %564 = vmatpush1.bf16.msra.mxu0 0
    %565 = vmatprep.subr.bf16.mxu0 0
    %566 = vmatpush1.bf16.msra.mxu0 0
    %567 = vmatprep.subr.bf16.mxu0 0
    %568 = vmatpush1.bf16.msra.mxu0 0
    %569 = vmatprep.mubr.bf16.mxu0 0
    %570 = vmatmul.mubr.bf16.gmra.mrb[0].mxu0 %v535
    %v571 = vpop.f32.mrb[0].mxu0
    %v572 = vadd.f32 0.0, %v571
    %v573 = vpop.f32.mrb[0].mxu0
    %v574 = vpop.f32.mrb[0].mxu0
    %v575 = vpop.f32.mrb[0].mxu0
    %576 = vdwg.mxu0
    %v578 = vrot.slane %v572, 4
    %v580 = vadd.f32 %v527, %v578
    %v581 = vxor.u32 %v580, 2147483648
    %v582 = vmul.f32 %v581, 1.442695
    %v583 = vpow.pop %v582
    %v584 = vadd.f32 %v583, 1.0
    %v585 = vrcp.pop %v584
    %v586 = vmul.f32 1.0, %v585
    %v587 = vtanh.pop %v580
    %v589 = vrot.slane %v427, 6
    %v591 = vmul.f32 %v586, %v589
    %593 = vrot.lane.b32.xlu0 %v587, 64
    %v594 = vpop.permute.xlu0 %593
    %v596 = vmul.f32 %v586, %v594
    %598 = vrot.lane.b32.xlu0 %v596, 32
    %v599 = vpop.permute.xlu0 %598
    %v601 = vadd.f32 %v591, %v599
    %v602 = vtanh.pop %v601
    %604 = vrot.lane.b32.xlu0 %v602, 64
    %v605 = vpop.permute.xlu0 %604
    %v607 = vmul.f32 %v586, %v605
    %v608 = vpack.c.bf16 %v512, %v512
    %v610 = vrot.slane %v608, 2
    %611 = vrot.lane.b32.xlu0 %v610, 32
    %v612 = vpop.permute.xlu0 %611
    %v614 = vsel %vm120, %v612, 0
    %616 = vmatprep.subr.bf16.mxu0 0
    %617 = vmatpush1.bf16.msra.mxu0 %v269
    %618 = vmatprep.subr.bf16.mxu0 0
    %619 = vmatpush1.bf16.msra.mxu0 %v270
    %620 = vmatprep.subr.bf16.mxu0 0
    %621 = vmatpush1.bf16.msra.mxu0 0
    %622 = vmatprep.subr.bf16.mxu0 0
    %623 = vmatpush1.bf16.msra.mxu0 0
    %624 = vmatprep.subr.bf16.mxu0 0
    %625 = vmatpush1.bf16.msra.mxu0 0
    %626 = vmatprep.subr.bf16.mxu0 0
    %627 = vmatpush1.bf16.msra.mxu0 0
    %628 = vmatprep.subr.bf16.mxu0 0
    %629 = vmatpush1.bf16.msra.mxu0 0
    %630 = vmatprep.subr.bf16.mxu0 0
    %631 = vmatpush1.bf16.msra.mxu0 0
    %632 = vmatprep.subr.bf16.mxu0 0
    %633 = vmatpush1.bf16.msra.mxu0 0
    %634 = vmatprep.subr.bf16.mxu0 0
    %635 = vmatpush1.bf16.msra.mxu0 0
    %636 = vmatprep.subr.bf16.mxu0 0
    %637 = vmatpush1.bf16.msra.mxu0 0
    %638 = vmatprep.subr.bf16.mxu0 0
    %639 = vmatpush1.bf16.msra.mxu0 0
    %640 = vmatprep.subr.bf16.mxu0 0
    %641 = vmatpush1.bf16.msra.mxu0 0
    %642 = vmatprep.subr.bf16.mxu0 0
    %643 = vmatpush1.bf16.msra.mxu0 0
    %644 = vmatprep.subr.bf16.mxu0 0
    %645 = vmatpush1.bf16.msra.mxu0 0
    %646 = vmatprep.subr.bf16.mxu0 0
    %647 = vmatpush1.bf16.msra.mxu0 0
    %648 = vmatprep.mubr.bf16.mxu0 0
    %649 = vmatmul.mubr.bf16.gmra.mrb[0].mxu0 %v614
    %v650 = vpop.f32.mrb[0].mxu0
    %v651 = vadd.f32 0.0, %v650
    %v652 = vpop.f32.mrb[0].mxu0
    %v653 = vpop.f32.mrb[0].mxu0
    %v654 = vpop.f32.mrb[0].mxu0
    %655 = vdwg.mxu0
    %v657 = vrot.slane %v651, 6
    %v659 = vadd.f32 %v528, %v657
    %v660 = vxor.u32 %v659, 2147483648
    %v661 = vmul.f32 %v660, 1.442695
    %v662 = vpow.pop %v661
    %v663 = vadd.f32 %v662, 1.0
    %v664 = vrcp.pop %v663
    %v665 = vmul.f32 1.0, %v664
    %v666 = vtanh.pop %v659
    %v668 = vrot.slane %v506, 2
    %v670 = vmul.f32 %v665, %v668
    %672 = vrot.lane.b32.xlu0 %v666, 64
    %v673 = vpop.permute.xlu0 %672
    %v675 = vmul.f32 %v665, %v673
    %677 = vrot.lane.b32.xlu0 %v675, 32
    %v678 = vpop.permute.xlu0 %677
    %v680 = vadd.f32 %v670, %v678
    %v681 = vtanh.pop %v680
    %683 = vrot.lane.b32.xlu0 %v681, 64
    %v684 = vpop.permute.xlu0 %683
    %v686 = vmul.f32 %v665, %v684
    %688 = vrot.lane.b32.xlu0 %v607, 32
    %v689 = vpop.permute.xlu0 %688
    %s691 = scalar_lea.vmem [#allocation3], 4
    %692 = vst.msk [vmem:[%s691 - $0x4] sm:$0x30] %vm525, %v689
    %694 = vrot.lane.b32.xlu0 %v686, 32
    %v695 = vpop.permute.xlu0 %694
    %s697 = scalar_lea.vmem [#allocation4], 10
    %698 = vst.msk [vmem:[%s697 - $0x2] sm:$0xc] %vm518, %v695
    %v699 = vld [vmem:[#allocation2] sm:$0xc0]
    %v700 = vld [vmem:[#allocation2 + $0x18] sm:$0x3]
    %v701 = vpack.c.bf16 %v607, %v607
    %v703 = vrot.slane %v701, 2
    %704 = vrot.lane.b32.xlu0 %v703, 32
    %v705 = vpop.permute.xlu0 %704
    %v707 = vsel %vm120, %v705, 0
    %709 = vmatprep.subr.bf16.mxu0 0
    %710 = vmatpush1.bf16.msra.mxu0 %v189
    %711 = vmatprep.subr.bf16.mxu0 0
    %712 = vmatpush1.bf16.msra.mxu0 %v190
    %713 = vmatprep.subr.bf16.mxu0 0
    %714 = vmatpush1.bf16.msra.mxu0 0
    %715 = vmatprep.subr.bf16.mxu0 0
    %716 = vmatpush1.bf16.msra.mxu0 0
    %717 = vmatprep.subr.bf16.mxu0 0
    %718 = vmatpush1.bf16.msra.mxu0 0
    %719 = vmatprep.subr.bf16.mxu0 0
    %720 = vmatpush1.bf16.msra.mxu0 0
    %721 = vmatprep.subr.bf16.mxu0 0
    %722 = vmatpush1.bf16.msra.mxu0 0
    %723 = vmatprep.subr.bf16.mxu0 0
    %724 = vmatpush1.bf16.msra.mxu0 0
    %725 = vmatprep.subr.bf16.mxu0 0
    %726 = vmatpush1.bf16.msra.mxu0 0
    %727 = vmatprep.subr.bf16.mxu0 0
    %728 = vmatpush1.bf16.msra.mxu0 0
    %729 = vmatprep.subr.bf16.mxu0 0
    %730 = vmatpush1.bf16.msra.mxu0 0
    %731 = vmatprep.subr.bf16.mxu0 0
    %732 = vmatpush1.bf16.msra.mxu0 0
    %733 = vmatprep.subr.bf16.mxu0 0
    %734 = vmatpush1.bf16.msra.mxu0 0
    %735 = vmatprep.subr.bf16.mxu0 0
    %736 = vmatpush1.bf16.msra.mxu0 0
    %737 = vmatprep.subr.bf16.mxu0 0
    %738 = vmatpush1.bf16.msra.mxu0 0
    %739 = vmatprep.subr.bf16.mxu0 0
    %740 = vmatpush1.bf16.msra.mxu0 0
    %741 = vmatprep.mubr.bf16.mxu0 0
    %742 = vmatmul.mubr.bf16.gmra.mrb[0].mxu0 %v707
    %v743 = vpop.f32.mrb[0].mxu0
    %v744 = vadd.f32 0.0, %v743
    %v745 = vpop.f32.mrb[0].mxu0
    %v746 = vpop.f32.mrb[0].mxu0
    %v747 = vpop.f32.mrb[0].mxu0
    %748 = vdwg.mxu0
    %v750 = vrot.slane %v744, 2
    %v752 = vadd.f32 %v699, %v750
    %v753 = vxor.u32 %v752, 2147483648
    %v754 = vmul.f32 %v753, 1.442695
    %v755 = vpow.pop %v754
    %v756 = vadd.f32 %v755, 1.0
    %v757 = vrcp.pop %v756
    %v758 = vmul.f32 1.0, %v757
    %v759 = vtanh.pop %v752
    %v761 = vrot.slane %v601, 6
    %v763 = vmul.f32 %v758, %v761
    %765 = vrot.lane.b32.xlu0 %v759, 64
    %v766 = vpop.permute.xlu0 %765
    %v768 = vmul.f32 %v758, %v766
    %770 = vrot.lane.b32.xlu0 %v768, 32
    %v771 = vpop.permute.xlu0 %770
    %v773 = vadd.f32 %v763, %v771
    %v774 = vtanh.pop %v773
    %776 = vrot.lane.b32.xlu0 %v774, 64
    %v777 = vpop.permute.xlu0 %776
    %v779 = vmul.f32 %v758, %v777
    %v780 = vpack.c.bf16 %v686, %v686
    %v782 = vrot.slane %v780, 1
    %783 = vrot.lane.b32.xlu0 %v782, 32
    %v784 = vpop.permute.xlu0 %783
    %v786 = vsel %vm120, %v784, 0
    %788 = vmatprep.subr.bf16.mxu0 0
    %789 = vmatpush1.bf16.msra.mxu0 %v269
    %790 = vmatprep.subr.bf16.mxu0 0
    %791 = vmatpush1.bf16.msra.mxu0 %v270
    %792 = vmatprep.subr.bf16.mxu0 0
    %793 = vmatpush1.bf16.msra.mxu0 0
    %794 = vmatprep.subr.bf16.mxu0 0
    %795 = vmatpush1.bf16.msra.mxu0 0
    %796 = vmatprep.subr.bf16.mxu0 0
    %797 = vmatpush1.bf16.msra.mxu0 0
    %798 = vmatprep.subr.bf16.mxu0 0
    %799 = vmatpush1.bf16.msra.mxu0 0
    %800 = vmatprep.subr.bf16.mxu0 0
    %801 = vmatpush1.bf16.msra.mxu0 0
    %802 = vmatprep.subr.bf16.mxu0 0
    %803 = vmatpush1.bf16.msra.mxu0 0
    %804 = vmatprep.subr.bf16.mxu0 0
    %805 = vmatpush1.bf16.msra.mxu0 0
    %806 = vmatprep.subr.bf16.mxu0 0
    %807 = vmatpush1.bf16.msra.mxu0 0
    %808 = vmatprep.subr.bf16.mxu0 0
    %809 = vmatpush1.bf16.msra.mxu0 0
    %810 = vmatprep.subr.bf16.mxu0 0
    %811 = vmatpush1.bf16.msra.mxu0 0
    %812 = vmatprep.subr.bf16.mxu0 0
    %813 = vmatpush1.bf16.msra.mxu0 0
    %814 = vmatprep.subr.bf16.mxu0 0
    %815 = vmatpush1.bf16.msra.mxu0 0
    %816 = vmatprep.subr.bf16.mxu0 0
    %817 = vmatpush1.bf16.msra.mxu0 0
    %818 = vmatprep.subr.bf16.mxu0 0
    %819 = vmatpush1.bf16.msra.mxu0 0
    %820 = vmatprep.mubr.bf16.mxu0 0
    %821 = vmatmul.mubr.bf16.gmra.mrb[0].mxu0 %v786
    %v822 = vpop.f32.mrb[0].mxu0
    %v823 = vadd.f32 0.0, %v822
    %v824 = vpop.f32.mrb[0].mxu0
    %v825 = vpop.f32.mrb[0].mxu0
    %v826 = vpop.f32.mrb[0].mxu0
    %827 = vdwg.mxu0
    %v828 = vadd.f32 %v700, %v823
    %v829 = vxor.u32 %v828, 2147483648
    %v830 = vmul.f32 %v829, 1.442695
    %v831 = vpow.pop %v830
    %v832 = vadd.f32 %v831, 1.0
    %v833 = vrcp.pop %v832
    %v834 = vmul.f32 1.0, %v833
    %v835 = vtanh.pop %v828
    %v837 = vrot.slane %v680, 2
    %v839 = vmul.f32 %v834, %v837
    %841 = vrot.lane.b32.xlu0 %v835, 64
    %v842 = vpop.permute.xlu0 %841
    %v844 = vmul.f32 %v834, %v842
    %846 = vrot.lane.b32.xlu0 %v844, 32
    %v847 = vpop.permute.xlu0 %846
    %v849 = vadd.f32 %v839, %v847
    %v850 = vtanh.pop %v849
    %852 = vrot.lane.b32.xlu0 %v850, 64
    %v853 = vpop.permute.xlu0 %852
    %v855 = vmul.f32 %v834, %v853
    %857 = vrot.lane.b32.xlu0 %v779, 32
    %v858 = vpop.permute.xlu0 %857
    %s860 = scalar_lea.vmem [#allocation3], 6
    %861 = vst.msk [vmem:[%s860 - $0x6] sm:$0xc0] %vm352, %v858
    %863 = vrot.lane.b32.xlu0 %v855, 32
    %v864 = vpop.permute.xlu0 %863
    %s866 = scalar_lea.vmem [#allocation4], 8
    %867 = vst.msk [vmem:[%s866] sm:$0x3] %vm345, %v864
    %v868 = vld [vmem:[#allocation2 + $0x10] sm:$0x3]
    %v869 = vld [vmem:[#allocation2 + $0x8] sm:$0xc0]
    %v870 = vpack.c.bf16 %v779, %v779
    %v872 = vrot.slane %v870, 3
    %873 = vrot.lane.b32.xlu0 %v872, 32
    %v874 = vpop.permute.xlu0 %873
    %v876 = vsel %vm120, %v874, 0
    %878 = vmatprep.subr.bf16.mxu0 0
    %879 = vmatpush1.bf16.msra.mxu0 %v189
    %880 = vmatprep.subr.bf16.mxu0 0
    %881 = vmatpush1.bf16.msra.mxu0 %v190
    %882 = vmatprep.subr.bf16.mxu0 0
    %883 = vmatpush1.bf16.msra.mxu0 0
    %884 = vmatprep.subr.bf16.mxu0 0
    %885 = vmatpush1.bf16.msra.mxu0 0
    %886 = vmatprep.subr.bf16.mxu0 0
    %887 = vmatpush1.bf16.msra.mxu0 0
    %888 = vmatprep.subr.bf16.mxu0 0
    %889 = vmatpush1.bf16.msra.mxu0 0
    %890 = vmatprep.subr.bf16.mxu0 0
    %891 = vmatpush1.bf16.msra.mxu0 0
    %892 = vmatprep.subr.bf16.mxu0 0
    %893 = vmatpush1.bf16.msra.mxu0 0
    %894 = vmatprep.subr.bf16.mxu0 0
    %895 = vmatpush1.bf16.msra.mxu0 0
    %896 = vmatprep.subr.bf16.mxu0 0
    %897 = vmatpush1.bf16.msra.mxu0 0
    %898 = vmatprep.subr.bf16.mxu0 0
    %899 = vmatpush1.bf16.msra.mxu0 0
    %900 = vmatprep.subr.bf16.mxu0 0
    %901 = vmatpush1.bf16.msra.mxu0 0
    %902 = vmatprep.subr.bf16.mxu0 0
    %903 = vmatpush1.bf16.msra.mxu0 0
    %904 = vmatprep.subr.bf16.mxu0 0
    %905 = vmatpush1.bf16.msra.mxu0 0
    %906 = vmatprep.subr.bf16.mxu0 0
    %907 = vmatpush1.bf16.msra.mxu0 0
    %908 = vmatprep.subr.bf16.mxu0 0
    %909 = vmatpush1.bf16.msra.mxu0 0
    %910 = vmatprep.mubr.bf16.mxu0 0
    %911 = vmatmul.mubr.bf16.gmra.mrb[0].mxu0 %v876
    %v912 = vpop.f32.mrb[0].mxu0
    %v913 = vadd.f32 0.0, %v912
    %v914 = vpop.f32.mrb[0].mxu0
    %v915 = vpop.f32.mrb[0].mxu0
    %v916 = vpop.f32.mrb[0].mxu0
    %917 = vdwg.mxu0
    %v918 = vadd.f32 %v868, %v913
    %v919 = vxor.u32 %v918, 2147483648
    %v920 = vmul.f32 %v919, 1.442695
    %v921 = vpow.pop %v920
    %v922 = vadd.f32 %v921, 1.0
    %v923 = vrcp.pop %v922
    %v924 = vmul.f32 1.0, %v923
    %v925 = vtanh.pop %v918
    %v927 = vrot.slane %v773, 6
    %v929 = vmul.f32 %v924, %v927
    %931 = vrot.lane.b32.xlu0 %v925, 64
    %v932 = vpop.permute.xlu0 %931
    %v934 = vmul.f32 %v924, %v932
    %936 = vrot.lane.b32.xlu0 %v934, 32
    %v937 = vpop.permute.xlu0 %936
    %v939 = vadd.f32 %v929, %v937
    %v940 = vtanh.pop %v939
    %942 = vrot.lane.b32.xlu0 %v940, 64
    %v943 = vpop.permute.xlu0 %942
    %v945 = vmul.f32 %v924, %v943
    %v946 = vpack.c.bf16 %v855, %v855
    %948 = vrot.lane.b32.xlu0 %v946, 32
    %v949 = vpop.permute.xlu0 %948
    %v951 = vsel %vm120, %v949, 0
    %953 = vmatprep.subr.bf16.mxu0 0
    %954 = vmatpush1.bf16.msra.mxu0 %v269
    %955 = vmatprep.subr.bf16.mxu0 0
    %956 = vmatpush1.bf16.msra.mxu0 %v270
    %957 = vmatprep.subr.bf16.mxu0 0
    %958 = vmatpush1.bf16.msra.mxu0 0
    %959 = vmatprep.subr.bf16.mxu0 0
    %960 = vmatpush1.bf16.msra.mxu0 0
    %961 = vmatprep.subr.bf16.mxu0 0
    %962 = vmatpush1.bf16.msra.mxu0 0
    %963 = vmatprep.subr.bf16.mxu0 0
    %964 = vmatpush1.bf16.msra.mxu0 0
    %965 = vmatprep.subr.bf16.mxu0 0
    %966 = vmatpush1.bf16.msra.mxu0 0
    %967 = vmatprep.subr.bf16.mxu0 0
    %968 = vmatpush1.bf16.msra.mxu0 0
    %969 = vmatprep.subr.bf16.mxu0 0
    %970 = vmatpush1.bf16.msra.mxu0 0
    %971 = vmatprep.subr.bf16.mxu0 0
    %972 = vmatpush1.bf16.msra.mxu0 0
    %973 = vmatprep.subr.bf16.mxu0 0
    %974 = vmatpush1.bf16.msra.mxu0 0
    %975 = vmatprep.subr.bf16.mxu0 0
    %976 = vmatpush1.bf16.msra.mxu0 0
    %977 = vmatprep.subr.bf16.mxu0 0
    %978 = vmatpush1.bf16.msra.mxu0 0
    %979 = vmatprep.subr.bf16.mxu0 0
    %980 = vmatpush1.bf16.msra.mxu0 0
    %981 = vmatprep.subr.bf16.mxu0 0
    %982 = vmatpush1.bf16.msra.mxu0 0
    %983 = vmatprep.subr.bf16.mxu0 0
    %984 = vmatpush1.bf16.msra.mxu0 0
    %985 = vmatprep.mubr.bf16.mxu0 0
    %986 = vmatmul.mubr.bf16.gmra.mrb[0].mxu0 %v951
    %v987 = vpop.f32.mrb[0].mxu0
    %v988 = vadd.f32 0.0, %v987
    %v989 = vpop.f32.mrb[0].mxu0
    %v990 = vpop.f32.mrb[0].mxu0
    %v991 = vpop.f32.mrb[0].mxu0
    %992 = vdwg.mxu0
    %v994 = vrot.slane %v988, 2
    %v996 = vadd.f32 %v869, %v994
    %v997 = vxor.u32 %v996, 2147483648
    %v998 = vmul.f32 %v997, 1.442695
    %v999 = vpow.pop %v998
    %v1000 = vadd.f32 %v999, 1.0
    %v1001 = vrcp.pop %v1000
    %v1002 = vmul.f32 1.0, %v1001
    %v1003 = vtanh.pop %v996
    %v1005 = vrot.slane %v849, 2
    %v1007 = vmul.f32 %v1002, %v1005
    %1009 = vrot.lane.b32.xlu0 %v1003, 64
    %v1010 = vpop.permute.xlu0 %1009
    %v1012 = vmul.f32 %v1002, %v1010
    %1014 = vrot.lane.b32.xlu0 %v1012, 32
    %v1015 = vpop.permute.xlu0 %1014
    %v1017 = vadd.f32 %v1007, %v1015
    %v1018 = vtanh.pop %v1017
    %1020 = vrot.lane.b32.xlu0 %v1018, 64
    %v1021 = vpop.permute.xlu0 %1020
    %v1023 = vmul.f32 %v1002, %v1021
    %1025 = vrot.lane.b32.xlu0 %v945, 32
    %v1026 = vpop.permute.xlu0 %1025
    %s1028 = scalar_lea.vmem [#allocation3], 8
    %1029 = vst.msk [vmem:[%s1028] sm:$0x3] %vm345, %v1026
    %1031 = vrot.lane.b32.xlu0 %v1023, 32
    %v1032 = vpop.permute.xlu0 %1031
    %s1034 = scalar_lea.vmem [#allocation4], 6
    %1035 = vst.msk [vmem:[%s1034 - $0x6] sm:$0xc0] %vm352, %v1032
    %v1036 = vld [vmem:[#allocation2 + $0x10] sm:$0xc]
    %v1037 = vld [vmem:[#allocation2 + $0x8] sm:$0x30]
    %v1038 = vpack.c.bf16 %v945, %v945
    %1040 = vrot.lane.b32.xlu0 %v1038, 32
    %v1041 = vpop.permute.xlu0 %1040
    %v1043 = vsel %vm120, %v1041, 0
    %1045 = vmatprep.subr.bf16.mxu0 0
    %1046 = vmatpush1.bf16.msra.mxu0 %v189
    %1047 = vmatprep.subr.bf16.mxu0 0
    %1048 = vmatpush1.bf16.msra.mxu0 %v190
    %1049 = vmatprep.subr.bf16.mxu0 0
    %1050 = vmatpush1.bf16.msra.mxu0 0
    %1051 = vmatprep.subr.bf16.mxu0 0
    %1052 = vmatpush1.bf16.msra.mxu0 0
    %1053 = vmatprep.subr.bf16.mxu0 0
    %1054 = vmatpush1.bf16.msra.mxu0 0
    %1055 = vmatprep.subr.bf16.mxu0 0
    %1056 = vmatpush1.bf16.msra.mxu0 0
    %1057 = vmatprep.subr.bf16.mxu0 0
    %1058 = vmatpush1.bf16.msra.mxu0 0
    %1059 = vmatprep.subr.bf16.mxu0 0
    %1060 = vmatpush1.bf16.msra.mxu0 0
    %1061 = vmatprep.subr.bf16.mxu0 0
    %1062 = vmatpush1.bf16.msra.mxu0 0
    %1063 = vmatprep.subr.bf16.mxu0 0
    %1064 = vmatpush1.bf16.msra.mxu0 0
    %1065 = vmatprep.subr.bf16.mxu0 0
    %1066 = vmatpush1.bf16.msra.mxu0 0
    %1067 = vmatprep.subr.bf16.mxu0 0
    %1068 = vmatpush1.bf16.msra.mxu0 0
    %1069 = vmatprep.subr.bf16.mxu0 0
    %1070 = vmatpush1.bf16.msra.mxu0 0
    %1071 = vmatprep.subr.bf16.mxu0 0
    %1072 = vmatpush1.bf16.msra.mxu0 0
    %1073 = vmatprep.subr.bf16.mxu0 0
    %1074 = vmatpush1.bf16.msra.mxu0 0
    %1075 = vmatprep.subr.bf16.mxu0 0
    %1076 = vmatpush1.bf16.msra.mxu0 0
    %1077 = vmatprep.mubr.bf16.mxu0 0
    %1078 = vmatmul.mubr.bf16.gmra.mrb[0].mxu0 %v1043
    %v1079 = vpop.f32.mrb[0].mxu0
    %v1080 = vadd.f32 0.0, %v1079
    %v1081 = vpop.f32.mrb[0].mxu0
    %v1082 = vpop.f32.mrb[0].mxu0
    %v1083 = vpop.f32.mrb[0].mxu0
    %1084 = vdwg.mxu0
    %v1086 = vrot.slane %v1080, 6
    %v1088 = vadd.f32 %v1036, %v1086
    %v1089 = vxor.u32 %v1088, 2147483648
    %v1090 = vmul.f32 %v1089, 1.442695
    %v1091 = vpow.pop %v1090
    %v1092 = vadd.f32 %v1091, 1.0
    %v1093 = vrcp.pop %v1092
    %v1094 = vmul.f32 1.0, %v1093
    %v1095 = vtanh.pop %v1088
    %v1097 = vrot.slane %v939, 6
    %v1099 = vmul.f32 %v1094, %v1097
    %1101 = vrot.lane.b32.xlu0 %v1095, 64
    %v1102 = vpop.permute.xlu0 %1101
    %v1104 = vmul.f32 %v1094, %v1102
    %1106 = vrot.lane.b32.xlu0 %v1104, 32
    %v1107 = vpop.permute.xlu0 %1106
    %v1109 = vadd.f32 %v1099, %v1107
    %v1110 = vtanh.pop %v1109
    %1112 = vrot.lane.b32.xlu0 %v1110, 64
    %v1113 = vpop.permute.xlu0 %1112
    %v1115 = vmul.f32 %v1094, %v1113
    %v1116 = vpack.c.bf16 %v1023, %v1023
    %v1118 = vrot.slane %v1116, 3
    %1119 = vrot.lane.b32.xlu0 %v1118, 32
    %v1120 = vpop.permute.xlu0 %1119
    %v1122 = vsel %vm120, %v1120, 0
    %1124 = vmatprep.subr.bf16.mxu0 0
    %1125 = vmatpush1.bf16.msra.mxu0 %v269
    %1126 = vmatprep.subr.bf16.mxu0 0
    %1127 = vmatpush1.bf16.msra.mxu0 %v270
    %1128 = vmatprep.subr.bf16.mxu0 0
    %1129 = vmatpush1.bf16.msra.mxu0 0
    %1130 = vmatprep.subr.bf16.mxu0 0
    %1131 = vmatpush1.bf16.msra.mxu0 0
    %1132 = vmatprep.subr.bf16.mxu0 0
    %1133 = vmatpush1.bf16.msra.mxu0 0
    %1134 = vmatprep.subr.bf16.mxu0 0
    %1135 = vmatpush1.bf16.msra.mxu0 0
    %1136 = vmatprep.subr.bf16.mxu0 0
    %1137 = vmatpush1.bf16.msra.mxu0 0
    %1138 = vmatprep.subr.bf16.mxu0 0
    %1139 = vmatpush1.bf16.msra.mxu0 0
    %1140 = vmatprep.subr.bf16.mxu0 0
    %1141 = vmatpush1.bf16.msra.mxu0 0
    %1142 = vmatprep.subr.bf16.mxu0 0
    %1143 = vmatpush1.bf16.msra.mxu0 0
    %1144 = vmatprep.subr.bf16.mxu0 0
    %1145 = vmatpush1.bf16.msra.mxu0 0
    %1146 = vmatprep.subr.bf16.mxu0 0
    %1147 = vmatpush1.bf16.msra.mxu0 0
    %1148 = vmatprep.subr.bf16.mxu0 0
    %1149 = vmatpush1.bf16.msra.mxu0 0
    %1150 = vmatprep.subr.bf16.mxu0 0
    %1151 = vmatpush1.bf16.msra.mxu0 0
    %1152 = vmatprep.subr.bf16.mxu0 0
    %1153 = vmatpush1.bf16.msra.mxu0 0
    %1154 = vmatprep.subr.bf16.mxu0 0
    %1155 = vmatpush1.bf16.msra.mxu0 0
    %1156 = vmatprep.mubr.bf16.mxu0 0
    %1157 = vmatmul.mubr.bf16.gmra.mrb[0].mxu0 %v1122
    %v1158 = vpop.f32.mrb[0].mxu0
    %v1159 = vadd.f32 0.0, %v1158
    %v1160 = vpop.f32.mrb[0].mxu0
    %v1161 = vpop.f32.mrb[0].mxu0
    %v1162 = vpop.f32.mrb[0].mxu0
    %1163 = vdwg.mxu0
    %v1165 = vrot.slane %v1159, 4
    %v1167 = vadd.f32 %v1037, %v1165
    %v1168 = vxor.u32 %v1167, 2147483648
    %v1169 = vmul.f32 %v1168, 1.442695
    %v1170 = vpow.pop %v1169
    %v1171 = vadd.f32 %v1170, 1.0
    %v1172 = vrcp.pop %v1171
    %v1173 = vmul.f32 1.0, %v1172
    %v1174 = vtanh.pop %v1167
    %v1176 = vrot.slane %v1017, 2
    %v1178 = vmul.f32 %v1173, %v1176
    %1180 = vrot.lane.b32.xlu0 %v1174, 64
    %v1181 = vpop.permute.xlu0 %1180
    %v1183 = vmul.f32 %v1173, %v1181
    %1185 = vrot.lane.b32.xlu0 %v1183, 32
    %v1186 = vpop.permute.xlu0 %1185
    %v1188 = vadd.f32 %v1178, %v1186
    %v1189 = vtanh.pop %v1188
    %1191 = vrot.lane.b32.xlu0 %v1189, 64
    %v1192 = vpop.permute.xlu0 %1191
    %v1194 = vmul.f32 %v1173, %v1192
    %1196 = vrot.lane.b32.xlu0 %v1115, 32
    %v1197 = vpop.permute.xlu0 %1196
    %s1199 = scalar_lea.vmem [#allocation3], 10
    %1200 = vst.msk [vmem:[%s1199 - $0x2] sm:$0xc] %vm518, %v1197
    %1202 = vrot.lane.b32.xlu0 %v1194, 32
    %v1203 = vpop.permute.xlu0 %1202
    %s1205 = scalar_lea.vmem [#allocation4], 4
    %1206 = vst.msk [vmem:[%s1205 - $0x4] sm:$0x30] %vm525, %v1203
    %v1207 = vld [vmem:[#allocation2 + $0x10] sm:$0x30]
    %v1208 = vld [vmem:[#allocation2 + $0x8] sm:$0xc]
    %v1209 = vpack.c.bf16 %v1115, %v1115
    %v1211 = vrot.slane %v1209, 1
    %1212 = vrot.lane.b32.xlu0 %v1211, 32
    %v1213 = vpop.permute.xlu0 %1212
    %v1215 = vsel %vm120, %v1213, 0
    %1217 = vmatprep.subr.bf16.mxu0 0
    %1218 = vmatpush1.bf16.msra.mxu0 %v189
    %1219 = vmatprep.subr.bf16.mxu0 0
    %1220 = vmatpush1.bf16.msra.mxu0 %v190
    %1221 = vmatprep.subr.bf16.mxu0 0
    %1222 = vmatpush1.bf16.msra.mxu0 0
    %1223 = vmatprep.subr.bf16.mxu0 0
    %1224 = vmatpush1.bf16.msra.mxu0 0
    %1225 = vmatprep.subr.bf16.mxu0 0
    %1226 = vmatpush1.bf16.msra.mxu0 0
    %1227 = vmatprep.subr.bf16.mxu0 0
    %1228 = vmatpush1.bf16.msra.mxu0 0
    %1229 = vmatprep.subr.bf16.mxu0 0
    %1230 = vmatpush1.bf16.msra.mxu0 0
    %1231 = vmatprep.subr.bf16.mxu0 0
    %1232 = vmatpush1.bf16.msra.mxu0 0
    %1233 = vmatprep.subr.bf16.mxu0 0
    %1234 = vmatpush1.bf16.msra.mxu0 0
    %1235 = vmatprep.subr.bf16.mxu0 0
    %1236 = vmatpush1.bf16.msra.mxu0 0
    %1237 = vmatprep.subr.bf16.mxu0 0
    %1238 = vmatpush1.bf16.msra.mxu0 0
    %1239 = vmatprep.subr.bf16.mxu0 0
    %1240 = vmatpush1.bf16.msra.mxu0 0
    %1241 = vmatprep.subr.bf16.mxu0 0
    %1242 = vmatpush1.bf16.msra.mxu0 0
    %1243 = vmatprep.subr.bf16.mxu0 0
    %1244 = vmatpush1.bf16.msra.mxu0 0
    %1245 = vmatprep.subr.bf16.mxu0 0
    %1246 = vmatpush1.bf16.msra.mxu0 0
    %1247 = vmatprep.subr.bf16.mxu0 0
    %1248 = vmatpush1.bf16.msra.mxu0 0
    %1249 = vmatprep.mubr.bf16.mxu0 0
    %1250 = vmatmul.mubr.bf16.gmra.mrb[0].mxu0 %v1215
    %v1251 = vpop.f32.mrb[0].mxu0
    %v1252 = vadd.f32 0.0, %v1251
    %v1253 = vpop.f32.mrb[0].mxu0
    %v1254 = vpop.f32.mrb[0].mxu0
    %v1255 = vpop.f32.mrb[0].mxu0
    %1256 = vdwg.mxu0
    %v1258 = vrot.slane %v1252, 4
    %v1260 = vadd.f32 %v1207, %v1258
    %v1261 = vxor.u32 %v1260, 2147483648
    %v1262 = vmul.f32 %v1261, 1.442695
    %v1263 = vpow.pop %v1262
    %v1264 = vadd.f32 %v1263, 1.0
    %v1265 = vrcp.pop %v1264
    %v1266 = vmul.f32 1.0, %v1265
    %v1267 = vtanh.pop %v1260
    %v1269 = vrot.slane %v1109, 6
    %v1271 = vmul.f32 %v1266, %v1269
    %1273 = vrot.lane.b32.xlu0 %v1267, 64
    %v1274 = vpop.permute.xlu0 %1273
    %v1276 = vmul.f32 %v1266, %v1274
    %1278 = vrot.lane.b32.xlu0 %v1276, 32
    %v1279 = vpop.permute.xlu0 %1278
    %v1281 = vadd.f32 %v1271, %v1279
    %v1282 = vtanh.pop %v1281
    %1284 = vrot.lane.b32.xlu0 %v1282, 64
    %v1285 = vpop.permute.xlu0 %1284
    %v1287 = vmul.f32 %v1266, %v1285
    %v1288 = vpack.c.bf16 %v1194, %v1194
    %v1290 = vrot.slane %v1288, 2
    %1291 = vrot.lane.b32.xlu0 %v1290, 32
    %v1292 = vpop.permute.xlu0 %1291
    %v1294 = vsel %vm120, %v1292, 0
    %1296 = vmatprep.subr.bf16.mxu0 0
    %1297 = vmatpush1.bf16.msra.mxu0 %v269
    %1298 = vmatprep.subr.bf16.mxu0 0
    %1299 = vmatpush1.bf16.msra.mxu0 %v270
    %1300 = vmatprep.subr.bf16.mxu0 0
    %1301 = vmatpush1.bf16.msra.mxu0 0
    %1302 = vmatprep.subr.bf16.mxu0 0
    %1303 = vmatpush1.bf16.msra.mxu0 0
    %1304 = vmatprep.subr.bf16.mxu0 0
    %1305 = vmatpush1.bf16.msra.mxu0 0
    %1306 = vmatprep.subr.bf16.mxu0 0
    %1307 = vmatpush1.bf16.msra.mxu0 0
    %1308 = vmatprep.subr.bf16.mxu0 0
    %1309 = vmatpush1.bf16.msra.mxu0 0
    %1310 = vmatprep.subr.bf16.mxu0 0
    %1311 = vmatpush1.bf16.msra.mxu0 0
    %1312 = vmatprep.subr.bf16.mxu0 0
    %1313 = vmatpush1.bf16.msra.mxu0 0
    %1314 = vmatprep.subr.bf16.mxu0 0
    %1315 = vmatpush1.bf16.msra.mxu0 0
    %1316 = vmatprep.subr.bf16.mxu0 0
    %1317 = vmatpush1.bf16.msra.mxu0 0
    %1318 = vmatprep.subr.bf16.mxu0 0
    %1319 = vmatpush1.bf16.msra.mxu0 0
    %1320 = vmatprep.subr.bf16.mxu0 0
    %1321 = vmatpush1.bf16.msra.mxu0 0
    %1322 = vmatprep.subr.bf16.mxu0 0
    %1323 = vmatpush1.bf16.msra.mxu0 0
    %1324 = vmatprep.subr.bf16.mxu0 0
    %1325 = vmatpush1.bf16.msra.mxu0 0
    %1326 = vmatprep.subr.bf16.mxu0 0
    %1327 = vmatpush1.bf16.msra.mxu0 0
    %1328 = vmatprep.mubr.bf16.mxu0 0
    %1329 = vmatmul.mubr.bf16.gmra.mrb[0].mxu0 %v1294
    %v1330 = vpop.f32.mrb[0].mxu0
    %v1331 = vadd.f32 0.0, %v1330
    %v1332 = vpop.f32.mrb[0].mxu0
    %v1333 = vpop.f32.mrb[0].mxu0
    %v1334 = vpop.f32.mrb[0].mxu0
    %1335 = vdwg.mxu0
    %v1337 = vrot.slane %v1331, 6
    %v1339 = vadd.f32 %v1208, %v1337
    %v1340 = vxor.u32 %v1339, 2147483648
    %v1341 = vmul.f32 %v1340, 1.442695
    %v1342 = vpow.pop %v1341
    %v1343 = vadd.f32 %v1342, 1.0
    %v1344 = vrcp.pop %v1343
    %v1345 = vmul.f32 1.0, %v1344
    %v1346 = vtanh.pop %v1339
    %v1348 = vrot.slane %v1188, 2
    %v1350 = vmul.f32 %v1345, %v1348
    %1352 = vrot.lane.b32.xlu0 %v1346, 64
    %v1353 = vpop.permute.xlu0 %1352
    %v1355 = vmul.f32 %v1345, %v1353
    %1357 = vrot.lane.b32.xlu0 %v1355, 32
    %v1358 = vpop.permute.xlu0 %1357
    %v1360 = vadd.f32 %v1350, %v1358
    %v1361 = vtanh.pop %v1360
    %1363 = vrot.lane.b32.xlu0 %v1361, 64
    %v1364 = vpop.permute.xlu0 %1363
    %v1366 = vmul.f32 %v1345, %v1364
    %1368 = vrot.lane.b32.xlu0 %v1287, 32
    %v1369 = vpop.permute.xlu0 %1368
    %s1371 = scalar_lea.vmem [#allocation3], 12
    %1372 = vst.msk [vmem:[%s1371 - $0x4] sm:$0x30] %vm525, %v1369
    %1374 = vrot.lane.b32.xlu0 %v1366, 32
    %v1375 = vpop.permute.xlu0 %1374
    %s1377 = scalar_lea.vmem [#allocation4], 2
    %1378 = vst.msk [vmem:[%s1377 - $0x2] sm:$0xc] %vm518, %v1375
    %v1379 = vld [vmem:[#allocation2 + $0x10] sm:$0xc0]
    %v1380 = vld [vmem:[#allocation2 + $0x8] sm:$0x3]
    %v1381 = vpack.c.bf16 %v1287, %v1287
    %v1383 = vrot.slane %v1381, 2
    %1384 = vrot.lane.b32.xlu0 %v1383, 32
    %v1385 = vpop.permute.xlu0 %1384
    %v1387 = vsel %vm120, %v1385, 0
    %1389 = vmatprep.subr.bf16.mxu0 0
    %1390 = vmatpush1.bf16.msra.mxu0 %v189
    %1391 = vmatprep.subr.bf16.mxu0 0
    %1392 = vmatpush1.bf16.msra.mxu0 %v190
    %1393 = vmatprep.subr.bf16.mxu0 0
    %1394 = vmatpush1.bf16.msra.mxu0 0
    %1395 = vmatprep.subr.bf16.mxu0 0
    %1396 = vmatpush1.bf16.msra.mxu0 0
    %1397 = vmatprep.subr.bf16.mxu0 0
    %1398 = vmatpush1.bf16.msra.mxu0 0
    %1399 = vmatprep.subr.bf16.mxu0 0
    %1400 = vmatpush1.bf16.msra.mxu0 0
    %1401 = vmatprep.subr.bf16.mxu0 0
    %1402 = vmatpush1.bf16.msra.mxu0 0
    %1403 = vmatprep.subr.bf16.mxu0 0
    %1404 = vmatpush1.bf16.msra.mxu0 0
    %1405 = vmatprep.subr.bf16.mxu0 0
    %1406 = vmatpush1.bf16.msra.mxu0 0
    %1407 = vmatprep.subr.bf16.mxu0 0
    %1408 = vmatpush1.bf16.msra.mxu0 0
    %1409 = vmatprep.subr.bf16.mxu0 0
    %1410 = vmatpush1.bf16.msra.mxu0 0
    %1411 = vmatprep.subr.bf16.mxu0 0
    %1412 = vmatpush1.bf16.msra.mxu0 0
    %1413 = vmatprep.subr.bf16.mxu0 0
    %1414 = vmatpush1.bf16.msra.mxu0 0
    %1415 = vmatprep.subr.bf16.mxu0 0
    %1416 = vmatpush1.bf16.msra.mxu0 0
    %1417 = vmatprep.subr.bf16.mxu0 0
    %1418 = vmatpush1.bf16.msra.mxu0 0
    %1419 = vmatprep.subr.bf16.mxu0 0
    %1420 = vmatpush1.bf16.msra.mxu0 0
    %1421 = vmatprep.mubr.bf16.mxu0 0
    %1422 = vmatmul.mubr.bf16.gmra.mrb[0].mxu0 %v1387
    %v1423 = vpop.f32.mrb[0].mxu0
    %v1424 = vadd.f32 0.0, %v1423
    %v1425 = vpop.f32.mrb[0].mxu0
    %v1426 = vpop.f32.mrb[0].mxu0
    %v1427 = vpop.f32.mrb[0].mxu0
    %1428 = vdwg.mxu0
    %v1430 = vrot.slane %v1424, 2
    %v1432 = vadd.f32 %v1379, %v1430
    %v1433 = vxor.u32 %v1432, 2147483648
    %v1434 = vmul.f32 %v1433, 1.442695
    %v1435 = vpow.pop %v1434
    %v1436 = vadd.f32 %v1435, 1.0
    %v1437 = vrcp.pop %v1436
    %v1438 = vmul.f32 1.0, %v1437
    %v1439 = vtanh.pop %v1432
    %v1441 = vrot.slane %v1281, 6
    %v1443 = vmul.f32 %v1438, %v1441
    %1445 = vrot.lane.b32.xlu0 %v1439, 64
    %v1446 = vpop.permute.xlu0 %1445
    %v1448 = vmul.f32 %v1438, %v1446
    %1450 = vrot.lane.b32.xlu0 %v1448, 32
    %v1451 = vpop.permute.xlu0 %1450
    %v1453 = vadd.f32 %v1443, %v1451
    %v1454 = vtanh.pop %v1453
    %1456 = vrot.lane.b32.xlu0 %v1454, 64
    %v1457 = vpop.permute.xlu0 %1456
    %v1459 = vmul.f32 %v1438, %v1457
    %v1460 = vpack.c.bf16 %v1366, %v1366
    %v1462 = vrot.slane %v1460, 1
    %1463 = vrot.lane.b32.xlu0 %v1462, 32
    %v1464 = vpop.permute.xlu0 %1463
    %v1466 = vsel %vm120, %v1464, 0
    %1468 = vmatprep.subr.bf16.mxu0 0
    %1469 = vmatpush1.bf16.msra.mxu0 %v269
    %1470 = vmatprep.subr.bf16.mxu0 0
    %1471 = vmatpush1.bf16.msra.mxu0 %v270
    %1472 = vmatprep.subr.bf16.mxu0 0
    %1473 = vmatpush1.bf16.msra.mxu0 0
    %1474 = vmatprep.subr.bf16.mxu0 0
    %1475 = vmatpush1.bf16.msra.mxu0 0
    %1476 = vmatprep.subr.bf16.mxu0 0
    %1477 = vmatpush1.bf16.msra.mxu0 0
    %1478 = vmatprep.subr.bf16.mxu0 0
    %1479 = vmatpush1.bf16.msra.mxu0 0
    %1480 = vmatprep.subr.bf16.mxu0 0
    %1481 = vmatpush1.bf16.msra.mxu0 0
    %1482 = vmatprep.subr.bf16.mxu0 0
    %1483 = vmatpush1.bf16.msra.mxu0 0
    %1484 = vmatprep.subr.bf16.mxu0 0
    %1485 = vmatpush1.bf16.msra.mxu0 0
    %1486 = vmatprep.subr.bf16.mxu0 0
    %1487 = vmatpush1.bf16.msra.mxu0 0
    %1488 = vmatprep.subr.bf16.mxu0 0
    %1489 = vmatpush1.bf16.msra.mxu0 0
    %1490 = vmatprep.subr.bf16.mxu0 0
    %1491 = vmatpush1.bf16.msra.mxu0 0
    %1492 = vmatprep.subr.bf16.mxu0 0
    %1493 = vmatpush1.bf16.msra.mxu0 0
    %1494 = vmatprep.subr.bf16.mxu0 0
    %1495 = vmatpush1.bf16.msra.mxu0 0
    %1496 = vmatprep.subr.bf16.mxu0 0
    %1497 = vmatpush1.bf16.msra.mxu0 0
    %1498 = vmatprep.subr.bf16.mxu0 0
    %1499 = vmatpush1.bf16.msra.mxu0 0
    %1500 = vmatprep.mubr.bf16.mxu0 0
    %1501 = vmatmul.mubr.bf16.gmra.mrb[0].mxu0 %v1466
    %v1502 = vpop.f32.mrb[0].mxu0
    %v1503 = vadd.f32 0.0, %v1502
    %v1504 = vpop.f32.mrb[0].mxu0
    %v1505 = vpop.f32.mrb[0].mxu0
    %v1506 = vpop.f32.mrb[0].mxu0
    %1507 = vdwg.mxu0
    %v1508 = vadd.f32 %v1380, %v1503
    %v1509 = vxor.u32 %v1508, 2147483648
    %v1510 = vmul.f32 %v1509, 1.442695
    %v1511 = vpow.pop %v1510
    %v1512 = vadd.f32 %v1511, 1.0
    %v1513 = vrcp.pop %v1512
    %v1514 = vmul.f32 1.0, %v1513
    %v1515 = vtanh.pop %v1508
    %v1517 = vrot.slane %v1360, 2
    %v1519 = vmul.f32 %v1514, %v1517
    %1521 = vrot.lane.b32.xlu0 %v1515, 64
    %v1522 = vpop.permute.xlu0 %1521
    %v1524 = vmul.f32 %v1514, %v1522
    %1526 = vrot.lane.b32.xlu0 %v1524, 32
    %v1527 = vpop.permute.xlu0 %1526
    %v1529 = vadd.f32 %v1519, %v1527
    %v1530 = vtanh.pop %v1529
    %1532 = vrot.lane.b32.xlu0 %v1530, 64
    %v1533 = vpop.permute.xlu0 %1532
    %v1535 = vmul.f32 %v1514, %v1533
    %1537 = vrot.lane.b32.xlu0 %v1459, 32
    %v1538 = vpop.permute.xlu0 %1537
    %s1540 = scalar_lea.vmem [#allocation3], 14
    %1541 = vst.msk [vmem:[%s1540 - $0x6] sm:$0xc0] %vm352, %v1538
    %1543 = vrot.lane.b32.xlu0 %v1535, 32
    %v1544 = vpop.permute.xlu0 %1543
    %1546 = vst.msk [vmem:[#allocation4] sm:$0x3] %vm345, %v1544
    %v1547 = vld [vmem:[#allocation3] sm:$0x3]
    %v1548 = vld [vmem:[#allocation3 + $0x2] sm:$0x3]
    %v1549 = vld [vmem:[#allocation3 + $0x4] sm:$0x3]
    %v1550 = vld [vmem:[#allocation3 + $0x6] sm:$0x3]
    %v1551 = vld [vmem:[#allocation3 + $0x8] sm:$0x3]
    %v1552 = vld [vmem:[#allocation3 + $0xa] sm:$0x3]
    %v1553 = vld [vmem:[#allocation3 + $0xc] sm:$0x3]
    %v1554 = vld [vmem:[#allocation3 + $0xe] sm:$0x3]
    %v1555 = vld [vmem:[#allocation4] sm:$0x3]
    %v1556 = vld [vmem:[#allocation4 + $0x2] sm:$0x3]
    %v1557 = vld [vmem:[#allocation4 + $0x4] sm:$0x3]
    %v1558 = vld [vmem:[#allocation4 + $0x6] sm:$0x3]
    %v1559 = vld [vmem:[#allocation4 + $0x8] sm:$0x3]
    %v1560 = vld [vmem:[#allocation4 + $0xa] sm:$0x3]
    %v1561 = vld [vmem:[#allocation4 + $0xc] sm:$0x3]
    %v1562 = vld [vmem:[#allocation4 + $0xe] sm:$0x3]
    %v1563 = vadd.f32 %v1547, %v1555
    %v1564 = vadd.f32 %v1548, %v1556
    %v1565 = vadd.f32 %v1549, %v1557
    %v1566 = vadd.f32 %v1550, %v1558
    %v1567 = vadd.f32 %v1551, %v1559
    %v1568 = vadd.f32 %v1552, %v1560
    %v1569 = vadd.f32 %v1553, %v1561
    %v1570 = vadd.f32 %v1554, %v1562
    %1571 = vst.msk [vmem:[#allocation13] sm:$0x3] %vm345, %v1563
    %1572 = vst.msk [vmem:[#allocation13 + $0x2] sm:$0x3] %vm345, %v1564
    %1573 = vst.msk [vmem:[#allocation13 + $0x4] sm:$0x3] %vm345, %v1565
    %1574 = vst.msk [vmem:[#allocation13 + $0x6] sm:$0x3] %vm345, %v1566
    %1575 = vst.msk [vmem:[#allocation13 + $0x8] sm:$0x3] %vm345, %v1567
    %1576 = vst.msk [vmem:[#allocation13 + $0xa] sm:$0x3] %vm345, %v1568
    %1577 = vst.msk [vmem:[#allocation13 + $0xc] sm:$0x3] %vm345, %v1569
    %1578 = vst.msk [vmem:[#allocation13 + $0xe] sm:$0x3] %vm345, %v1570
    %v1579 = vrot.slane %v1535, 2
    %v1581 = vadd.f32 %v1459, %v1579
    %1583 = vrot.lane.b32.xlu0 %v1581, 32
    %v1584 = vpop.permute.xlu0 %1583
    %1586 = vst.msk [vmem:[#allocation14 - $0x6] sm:$0xc0] %vm352, %v1584
    %v1588 = vrot.slane %v1529, 2
    %v1590 = vadd.f32 %v1453, %v1588
    %1592 = vrot.lane.b32.xlu0 %v1590, 96
    %v1593 = vpop.permute.xlu0 %1592
    %1595 = vst.msk [vmem:[#allocation16 - $0x6] sm:$0xc0] %vm352, %v1593
    // Predicated region
    $region38: #{tpu_custom_call.1} parent=1 // pred_check
      _
    $region39: #{tpu_custom_call.1} parent=1 // pred_check_branch
      %1597 = sbr.rel (0) target = $region41
    $region40: #{tpu_custom_call.1} parent=1 // pred_region
      %s1599 = ssub.s32 256, 256
      %1600 = vsyncadd [#allocation7], %s1599
      %s1601 = sshll.u32 [#allocation13], 4
      %s1602 = int_to_ptr.vmem [resolvable:$true] %s1601
      %1607 = dma.vmem_to_hbm [thread:$0]  %s1602, 256, %s5, [#allocation7], 32, 32, 2
    $region41: #{tpu_custom_call.1} parent=1 // pred_fallthru
      _
    // Predicated region
    $region42: #{tpu_custom_call.1} parent=1 // pred_check
      _
    $region43: #{tpu_custom_call.1} parent=1 // pred_check_branch
      %1609 = sbr.rel (0) target = $region45
    $region44: #{tpu_custom_call.1} parent=1 // pred_region
      %s1611 = ssub.s32 32, 32
      %1612 = vsyncadd [#allocation15], %s1611
      %s1614 = sshll.u32 [#allocation14], 4
      %s1615 = int_to_ptr.vmem [resolvable:$true] %s1614
      %1617 = dma.vmem_to_hbm [thread:$0]  %s1615, 32, %s6, [#allocation15]
    $region45: #{tpu_custom_call.1} parent=1 // pred_fallthru
      _
    // Predicated region
    $region46: #{tpu_custom_call.1} parent=1 // pred_check
      _
    $region47: #{tpu_custom_call.1} parent=1 // pred_check_branch
      %1619 = sbr.rel (0) target = $region49
    $region48: #{tpu_custom_call.1} parent=1 // pred_region
      %s1621 = ssub.s32 32, 32
      %1622 = vsyncadd [#allocation15], %s1621
      %s1624 = sshll.u32 [#allocation16], 4
      %s1625 = int_to_ptr.vmem [resolvable:$true] %s1624
      %1627 = dma.vmem_to_hbm [thread:$0]  %s1625, 32, %s7, [#allocation15]
    $region49: #{tpu_custom_call.1} parent=1 // pred_fallthru
      _
    // Predicated region
    $region50: #{tpu_custom_call.1} parent=1 // pred_check
      _
    $region51: #{tpu_custom_call.1} parent=1 // pred_check_branch
      %1629 = sbr.rel (0) target = $region53
    $region52: #{tpu_custom_call.1} parent=1 // pred_region
      %1630 = dma.done [#allocation7], 256
    $region53: #{tpu_custom_call.1} parent=1 // pred_fallthru
      _
    // Predicated region
    $region54: #{tpu_custom_call.1} parent=1 // pred_check
      _
    $region55: #{tpu_custom_call.1} parent=1 // pred_check_branch
      %1632 = sbr.rel (0) target = $region57
    $region56: #{tpu_custom_call.1} parent=1 // pred_region
      %1633 = dma.done [#allocation15], 32
    $region57: #{tpu_custom_call.1} parent=1 // pred_fallthru
      _
    // Predicated region
    $region58: #{tpu_custom_call.1} parent=1 // pred_check
      _
    $region59: #{tpu_custom_call.1} parent=1 // pred_check_branch
      %1635 = sbr.rel (0) target = $region61
    $region60: #{tpu_custom_call.1} parent=1 // pred_region
      %1636 = dma.done [#allocation15], 32
    $region61: #{tpu_custom_call.1} parent=1 // pred_fallthru
      _
    %1637 = vsyncpa [#allocation6], 1
    %1638 = vsyncpa [#allocation9], 1
    %1639 = vsyncpa [#allocation12], 1
    %1640 = vsyncpa [#allocation7], 1
    %1641 = vsyncpa [#allocation15], 1

</llo_original>
